<compile_context>
chip_gen: v6e
topology: v6e:2x2x1
jax: 0.10.0
libtpu: 0.0.40
codegen_flags: <defaults>
</compile_context>

<pallas_src>
import functools
import math

import jax
import jax.numpy as jnp
from jax.experimental import pallas as pl
from jax.experimental.pallas import tpu as pltpu


# --------------------------------------------------------------------------------------
# one-time parameter preparation (review item: hoist out of the per-call wrappers)
# --------------------------------------------------------------------------------------
def prepare_mha_params(params, num_heads):
    """Pre-transpose / pre-pack weights, fold the 1/sqrt(D) scale into the q projection,
    and cast to bf16 once. Call once and reuse for every forward call."""
    E = params["wq"].shape[0]
    if E % num_heads != 0:
        raise ValueError("embed_dims must be divisible by num_heads")
    D = E // num_heads
    scale = 1.0 / math.sqrt(D)

    wqT = (params["wq"] * scale).T
    wkT = params["wk"].T
    wvT = params["wv"].T
    bq = params["bq"] * scale

    return {
        "num_heads": num_heads,
        "embed_dims": E,
        # fused projections for the self-attention fast path
        "w_qk": jnp.concatenate([wqT, wkT], axis=1).astype(jnp.bfloat16),        # (E, 2E)
        "b_qk": jnp.concatenate([bq, params["bk"]]).reshape(1, 2 * E).astype(jnp.float32),
        "w_qkv": jnp.concatenate([wqT, wkT, wvT], axis=1).astype(jnp.bfloat16),  # (E, 3E)
        "b_qkv": jnp.concatenate([bq, params["bk"], params["bv"]]
                                 ).reshape(1, 3 * E).astype(jnp.float32),
        # separate projections for the general / cross-attention path
        "w_q": wqT.astype(jnp.bfloat16), "b_q": bq.reshape(1, E).astype(jnp.float32),
        "w_k": wkT.astype(jnp.bfloat16), "b_k": params["bk"].reshape(1, E).astype(jnp.float32),
        "w_v": wvT.astype(jnp.bfloat16), "b_v": params["bv"].reshape(1, E).astype(jnp.float32),
        # output projection
        "w_o": params["wo"].T.astype(jnp.bfloat16),
        "b_o": params["bo"].reshape(1, E).astype(jnp.float32),
    }


# --------------------------------------------------------------------------------------
# shared attention core (nb batch elements x H heads batched in ONE einsum)
# --------------------------------------------------------------------------------------
def _split_heads(t2, nb, L, H, D):
    """(nb*L, E) f32 -> (H*nb, L, D) bf16 for the MXU.

    One sublane-only reshape + H static lane slices total (NOT per batch element); the
    lane dim D is never produced by a reshape (only by slicing), so no risky lane-dim
    shape casts are emitted."""
    t3 = t2.reshape(nb, L, H * D)
    heads = [t3[:, :, h * D:(h + 1) * D] for h in range(H)]
    return jnp.stack(heads, axis=0).reshape(H * nb, L, D).astype(jnp.bfloat16)


def _merge_heads(ctx, nb, Lq, H, D):
    """(H*nb, Lq, D) f32 -> (nb*Lq, E) f32 (H lane concats total)."""
    c4 = ctx.reshape(H, nb, Lq, D)
    merged = jnp.concatenate([c4[h] for h in range(H)], axis=-1)   # (nb, Lq, E)
    return merged.reshape(nb * Lq, H * D)


def _attn_core(q2, k2, v2, nb, Lq, Lk, H, D):
    """q2: (nb*Lq, E) f32 with 1/sqrt(D) folded into the q projection.
    k2/v2: (nb*Lk, E) f32.  Returns (nb*Lq, E) f32 context (pre out-projection)."""
    qh = _split_heads(q2, nb, Lq, H, D)
    kh = _split_heads(k2, nb, Lk, H, D)
    vh = _split_heads(v2, nb, Lk, H, D)

    # one batched MXU call over all nb*H (batch, head) pairs; no per-head transposes
    s = jnp.einsum("bld,bmd->blm", qh, kh, preferred_element_type=jnp.float32)
    s = s - jnp.max(s, axis=-1, keepdims=True)              # f32 softmax statistics
    p = jnp.exp(s)
    p = p * pl.reciprocal(jnp.sum(p, axis=-1, keepdims=True), approx=True)   # EUP slot

    ctx = jnp.einsum("blm,bmd->bld", p.astype(jnp.bfloat16), vh,
                     preferred_element_type=jnp.float32)     # (H*nb, Lq, D) f32
    return _merge_heads(ctx, nb, Lq, H, D)


# --------------------------------------------------------------------------------------
# kernels
# --------------------------------------------------------------------------------------
def _mha_self_kernel(*refs, num_heads, has_pos):
    """Self-attention fast path: q_in = k_in = x + pos, value = identity = x."""
    if has_pos:
        (x_ref, pos_ref, wqk_ref, bqk_ref, wv_ref, bv_ref, wo_ref, bo_ref, o_ref) = refs
    else:
        (x_ref, wqkv_ref, bqkv_ref, wo_ref, bo_ref, o_ref) = refs

    nb, L, E = x_ref.shape
    H = num_heads
    D = E // H

    x = x_ref[...]                                       # native dtype, no f32 up-cast
    x2_bf = x.reshape(nb * L, E).astype(jnp.bfloat16)    # value / fused-qkv input

    if has_pos:
        qk_bf = (x + pos_ref[...]).reshape(nb * L, E).astype(jnp.bfloat16)
        qk = jnp.dot(qk_bf, wqk_ref[...],
                     preferred_element_type=jnp.float32) + bqk_ref[...]     # (nb*L, 2E)
        v2 = jnp.dot(x2_bf, wv_ref[...],
                     preferred_element_type=jnp.float32) + bv_ref[...]      # (nb*L, E)
        q2, k2 = qk[:, :E], qk[:, E:]
    else:
        qkv = jnp.dot(x2_bf, wqkv_ref[...],
                      preferred_element_type=jnp.float32) + bqkv_ref[...]   # (nb*L, 3E)
        q2, k2, v2 = qkv[:, :E], qkv[:, E:2 * E], qkv[:, 2 * E:]

    ctx = _attn_core(q2, k2, v2, nb, L, L, H, D)         # (nb*L, E) f32
    out = jnp.dot(ctx.astype(jnp.bfloat16), wo_ref[...],
                  preferred_element_type=jnp.float32) + bo_ref[...]
    res = x.reshape(nb * L, E).astype(jnp.float32) + out  # residual in f32
    o_ref[...] = res.reshape(nb, L, E).astype(o_ref.dtype)


def _mha_general_kernel(*refs, num_heads, has_qpos, has_kpos, sep_identity):
    """General / cross-attention path. Positional embeddings are added IN-KERNEL and
    identity aliases the raw query ref when they are the same tensor."""
    it = iter(refs)
    q_ref = next(it)
    qpos_ref = next(it) if has_qpos else None
    k_ref = next(it)
    kpos_ref = next(it) if has_kpos else None
    v_ref = next(it)
    id_ref = next(it) if sep_identity else None
    wq_ref, wk_ref, wv_ref, wo_ref = next(it), next(it), next(it), next(it)
    bq_ref, bk_ref, bv_ref, bo_ref = next(it), next(it), next(it), next(it)
    o_ref = next(it)

    nb, Lq, E = q_ref.shape
    Lk = k_ref.shape[1]
    H = num_heads
    D = E // H

    q_raw = q_ref[...]
    q_in = (q_raw + qpos_ref[...]) if has_qpos else q_raw
    k_in = (k_ref[...] + kpos_ref[...]) if has_kpos else k_ref[...]

    q_bf = q_in.reshape(nb * Lq, E).astype(jnp.bfloat16)
    k_bf = k_in.reshape(nb * Lk, E).astype(jnp.bfloat16)
    v_bf = v_ref[...].reshape(nb * Lk, E).astype(jnp.bfloat16)

    q2 = jnp.dot(q_bf, wq_ref[...], preferred_element_type=jnp.float32) + bq_ref[...]
    k2 = jnp.dot(k_bf, wk_ref[...], preferred_element_type=jnp.float32) + bk_ref[...]
    v2 = jnp.dot(v_bf, wv_ref[...], preferred_element_type=jnp.float32) + bv_ref[...]

    ctx = _attn_core(q2, k2, v2, nb, Lq, Lk, H, D)       # (nb*Lq, E) f32
    out = jnp.dot(ctx.astype(jnp.bfloat16), wo_ref[...],
                  preferred_element_type=jnp.float32) + bo_ref[...]

    ident = id_ref[...] if sep_identity else q_raw        # residual = identity (pre-pos)
    res = ident.reshape(nb * Lq, E).astype(jnp.float32) + out
    o_ref[...] = res.reshape(nb, Lq, E).astype(o_ref.dtype)


# --------------------------------------------------------------------------------------
# VMEM planning (generation-aware) and pallas_call wrappers
# --------------------------------------------------------------------------------------
def _vmem_limits():
    """(budget_bytes for picking the per-step batch block, vmem_limit_bytes for Mosaic)."""
    phys = 128 * 1024 * 1024
    try:
        info = pltpu.get_tpu_info()
        phys = int(getattr(info, "vmem_capacity_bytes", phys)) or phys
    except Exception:  # pragma: no cover - conservative fallback off-TPU
        pass
    budget = max(int(phys * 0.50), 16 * 1024 * 1024)      # per-step working-set budget
    limit = max(min(int(phys * 0.75), 100 * 1024 * 1024), 32 * 1024 * 1024)
    return budget, limit


def _pick_batch_block(batch, seq_q, seq_k, embed, heads, act_bytes,
                      n_q_acts, n_kv_acts, weight_bytes, budget_bytes):
    """Largest divisor of `batch` (<=8) whose per-step working set fits the VMEM budget,
    while keeping >=2 grid steps (when possible) so both v7x TensorCores get work."""
    def step_bytes(nb):
        # double-buffered activation I/O tiles (q-side inputs + output, kv-side inputs)
        io = nb * ((n_q_acts + 1) * seq_q + n_kv_acts * seq_k) * embed * act_bytes * 2
        # f32 projection/ctx/out intermediates + bf16 head-split copies (rough upper bound)
        inter = nb * (seq_q * 5 + seq_k * 4) * embed * 4
        # f32 scores + bf16 probabilities
        scores = nb * heads * seq_q * seq_k * 6
        return io + inter + scores + weight_bytes

    best = 1
    for nb in range(1, min(batch, 8) + 1):
        if batch % nb == 0 and step_bytes(nb) <= budget_bytes:
            best = nb
    if batch > 1 and batch // best < 2:                    # keep both v7x TCs busy
        for nb in range(best - 1, 0, -1):
            if batch % nb == 0:
                best = nb
                break
    return best


def _weight_spec(arr, single_buffered):
    if single_buffered:
        # constant index map => no double-buffering needed; halves weight VMEM residency
        return pl.BlockSpec(arr.shape, lambda i: (0,) * arr.ndim,
                            pipeline_mode=pl.Buffered(1))
    return pl.BlockSpec(arr.shape, lambda i: (0,) * arr.ndim)


def _mha_self_pallas(x, pos, prep):
    """x: (N, L, E); pos: (N, L, E) or None. Returns (N, L, E)."""
    N, L, E = x.shape
    H = prep["num_heads"]
    has_pos = pos is not None

    budget, vmem_limit = _vmem_limits()
    weight_bytes = 16 * E * E + 32 * E                     # bf16 weights (x2 buffered) + biases
    nb = _pick_batch_block(N, L, L, E, H, x.dtype.itemsize,
                           n_q_acts=1 + int(has_pos), n_kv_acts=0,
                           weight_bytes=weight_bytes, budget_bytes=budget)

    seq_spec = pl.BlockSpec((nb, L, E), lambda i: (i, 0, 0))

    def build(single_buf_weights):
        inputs, specs = [x], [seq_spec]
        if has_pos:
            inputs.append(pos)
            specs.append(seq_spec)
            wb = [prep["w_qk"], prep["b_qk"], prep["w_v"], prep["b_v"],
                  prep["w_o"], prep["b_o"]]
        else:
            wb = [prep["w_qkv"], prep["b_qkv"], prep["w_o"], prep["b_o"]]
        inputs += wb
        specs += [_weight_spec(a, single_buf_weights) for a in wb]

        kernel = functools.partial(_mha_self_kernel, num_heads=H, has_pos=has_pos)
        return pl.pallas_call(
            kernel,
            out_shape=jax.ShapeDtypeStruct((N, L, E), x.dtype),
            grid_spec=pltpu.PrefetchScalarGridSpec(
                num_scalar_prefetch=0,
                grid=(N // nb,),
                in_specs=specs,
                out_specs=seq_spec),
            compiler_params=pltpu.CompilerParams(
                dimension_semantics=("parallel",),
                vmem_limit_bytes=vmem_limit),
        )(*inputs)

    try:
        return build(True)
    except Exception:
        # TODO(synk): fallback for runtimes without pl.Buffered(1) single-buffering support.
        return build(False)


def _mha_general_pallas(q, qpos, k, kpos, v, identity, prep):
    """q/(identity): (N, Lq, E); k/v: (N, Lk, E); qpos/kpos optional. identity=None means
    the residual source is the raw query (no extra DMA). Returns (N, Lq, E)."""
    N, Lq, E = q.shape
    Lk = k.shape[1]
    H = prep["num_heads"]
    has_qpos = qpos is not None
    has_kpos = kpos is not None
    sep_identity = identity is not None

    budget, vmem_limit = _vmem_limits()
    weight_bytes = 16 * E * E + 32 * E
    nb = _pick_batch_block(N, Lq, Lk, E, H, q.dtype.itemsize,
                           n_q_acts=1 + int(has_qpos) + int(sep_identity),
                           n_kv_acts=2 + int(has_kpos),
                           weight_bytes=weight_bytes, budget_bytes=budget)

    q_spec = pl.BlockSpec((nb, Lq, E), lambda i: (i, 0, 0))
    kv_spec = pl.BlockSpec((nb, Lk, E), lambda i: (i, 0, 0))

    def build(single_buf_weights):
        inputs, specs = [q], [q_spec]
        if has_qpos:
            inputs.append(qpos)
            specs.append(q_spec)
        inputs.append(k)
        specs.append(kv_spec)
        if has_kpos:
            inputs.append(kpos)
            specs.append(kv_spec)
        inputs.append(v)
        specs.append(kv_spec)
        if sep_identity:
            inputs.append(identity)
            specs.append(q_spec)
        wb = [prep["w_q"], prep["w_k"], prep["w_v"], prep["w_o"],
              prep["b_q"], prep["b_k"], prep["b_v"], prep["b_o"]]
        inputs += wb
        specs += [_weight_spec(a, single_buf_weights) for a in wb]

        kernel = functools.partial(_mha_general_kernel, num_heads=H,
                                   has_qpos=has_qpos, has_kpos=has_kpos,
                                   sep_identity=sep_identity)
        return pl.pallas_call(
            kernel,
            out_shape=jax.ShapeDtypeStruct((N, Lq, E), q.dtype),
            grid_spec=pltpu.PrefetchScalarGridSpec(
                num_scalar_prefetch=0,
                grid=(N // nb,),
                in_specs=specs,
                out_specs=q_spec),
            compiler_params=pltpu.CompilerParams(
                dimension_semantics=("parallel",),
                vmem_limit_bytes=vmem_limit),
        )(*inputs)

    try:
        return build(True)
    except Exception:
        # TODO(synk): fallback for runtimes without pl.Buffered(1) single-buffering support.
        return build(False)


# --------------------------------------------------------------------------------------
# module-level forward (mirrors MultiheadAttention.forward)
# --------------------------------------------------------------------------------------
def multihead_attention_forward(prep, query, key=None, value=None, identity=None,
                                query_pos=None, key_pos=None,
                                attn_mask=None, key_padding_mask=None,
                                batch_first=False):
    if attn_mask is not None or key_padding_mask is not None:
        # TODO(synk): attn_mask / key_padding_mask are not implemented in this kernel.
        raise NotImplementedError("attn_mask / key_padding_mask are not supported")
    if query.shape[-1] != prep["embed_dims"]:
        raise ValueError("query embed dim does not match prepared params")
    H = prep["num_heads"]

    tob = (lambda t: t) if batch_first else (lambda t: jnp.transpose(t, (1, 0, 2)))
    frm = tob  # transpose is its own inverse

    # fast path: default self-attention (key/value/identity/key_pos all defaulted)
    if key is None and value is None and identity is None and key_pos is None:
        x = tob(query)
        pos = None if query_pos is None else tob(query_pos)
        return frm(_mha_self_pallas(x, pos, prep))

    # general path (possibly cross-attention); pos added in-kernel, identity aliased to
    # query when it is the same tensor (no extra HBM traffic)
    if key is None:
        key = query
    if value is None:
        value = key
    if key_pos is None and query_pos is not None and query_pos.shape == key.shape:
        key_pos = query_pos
    out = _mha_general_pallas(
        tob(query),
        None if query_pos is None else tob(query_pos),
        tob(key),
        None if key_pos is None else tob(key_pos),
        tob(value),
        None if identity is None else tob(identity),
        prep)
    return frm(out)


# --------------------------------------------------------------------------------------
# pure-JAX f32 reference + synthetic params + test
# --------------------------------------------------------------------------------------
def _reference(params, num_heads, query, key=None, value=None, identity=None,
               query_pos=None, key_pos=None):
    if key is None:
        key = query
    if value is None:
        value = key
    if identity is None:
        identity = query
    if key_pos is None and query_pos is not None and query_pos.shape == key.shape:
        key_pos = query_pos
    if query_pos is not None:
        query = query + query_pos
    if key_pos is not None:
        key = key + key_pos

    Lq, N, E = query.shape
    Lk = key.shape[0]
    D = E // num_heads
    scale = 1.0 / math.sqrt(D)

    def proj(x, w, b):
        return jnp.einsum("lne,fe->lnf", x, w) + b

    q = proj(query, params["wq"], params["bq"]) * scale
    k = proj(key, params["wk"], params["bk"])
    v = proj(value, params["wv"], params["bv"])

    def split(x, L):  # (L, N, E) -> (N, H, L, D)
        return jnp.transpose(x.reshape(L, N, num_heads, D), (1, 2, 0, 3))

    qh, kh, vh = split(q, Lq), split(k, Lk), split(v, Lk)
    s = jnp.einsum("nhld,nhmd->nhlm", qh, kh)
    p = jax.nn.softmax(s, axis=-1)
    ctx = jnp.einsum("nhlm,nhmd->nhld", p, vh)
    ctx = jnp.transpose(ctx, (2, 0, 1, 3)).reshape(Lq, N, E)
    out = jnp.einsum("lne,fe->lnf", ctx, params["wo"]) + params["bo"]
    return identity + out


def make_params(key, embed_dims):
    """Deterministic synthetic parameters (same shapes as nn.MultiheadAttention)."""
    E = embed_dims
    k1, k2 = jax.random.split(key)
    in_proj_weight = jax.random.normal(k1, (3 * E, E), jnp.float32) * 0.05
    in_proj_bias = jnp.linspace(-0.01, 0.01, 3 * E, dtype=jnp.float32)
    out_proj_weight = jax.random.normal(k2, (E, E), jnp.float32) * 0.05
    out_proj_bias = jnp.linspace(-0.005, 0.005, E, dtype=jnp.float32)
    return {
        "wq": in_proj_weight[0 * E:1 * E],
        "wk": in_proj_weight[1 * E:2 * E],
        "wv": in_proj_weight[2 * E:3 * E],
        "bq": in_proj_bias[0 * E:1 * E],
        "bk": in_proj_bias[1 * E:2 * E],
        "bv": in_proj_bias[2 * E:3 * E],
        "wo": out_proj_weight,
        "bo": out_proj_bias,
    }


if __name__ == "__main__":
    # Small shapes: seq L=8, batch N=2, embed E=32, heads=4 (head_dim=8).
    L, N, E, H = 8, 2, 32, 4
    S = 16  # key/value length for the cross-attention test
    root = jax.random.PRNGKey(0)
    kq, kp, kw, kk, kv, kb = jax.random.split(root, 6)

    query = jax.random.normal(kq, (L, N, E), jnp.float32)       # (L, N, E) seq-first
    query_pos = jax.random.normal(kp, (L, N, E), jnp.float32)
    key_t = jax.random.normal(kk, (S, N, E), jnp.float32)
    value_t = jax.random.normal(kv, (S, N, E), jnp.float32)
    params = make_params(kw, E)
    prep = prepare_mha_params(params, H)                        # one-time weight prep

    tol = dict(atol=2e-2, rtol=2e-2)   # bf16 MXU matmuls, f32 accumulation / softmax

    # 1) self-attention fast path with positional embedding
    out = jax.block_until_ready(
        multihead_attention_forward(prep, query, query_pos=query_pos))
    ref = _reference(params, H, query, query_pos=query_pos)
    assert out.shape == (L, N, E)
    assert jnp.allclose(out, ref, **tol), float(jnp.max(jnp.abs(out - ref)))

    # 2) self-attention fast path without positional embedding (fused (E,3E) projection)
    out0 = jax.block_until_ready(multihead_attention_forward(prep, query))
    ref0 = _reference(params, H, query)
    assert jnp.allclose(out0, ref0, **tol), float(jnp.max(jnp.abs(out0 - ref0)))

    # 3) general / cross-attention path (different key length, pos added in-kernel)
    out2 = jax.block_until_ready(
        multihead_attention_forward(prep, query, key=key_t, value=value_t,
                                    query_pos=query_pos))
    ref2 = _reference(params, H, query, key=key_t, value=value_t, query_pos=query_pos)
    assert out2.shape == (L, N, E)
    assert jnp.allclose(out2, ref2, **tol), float(jnp.max(jnp.abs(out2 - ref2)))

    # 4) larger batch exercising the nb>1 batched attention path (2 batch elems per step)
    q4 = jax.random.normal(kb, (L, 4, E), jnp.float32)
    out4 = jax.block_until_ready(multihead_attention_forward(prep, q4))
    ref4 = _reference(params, H, q4)
    assert jnp.allclose(out4, ref4, **tol), float(jnp.max(jnp.abs(out4 - ref4)))

    print("KERNEL_OK")
</pallas_src>

<mosaic_0001>
module attributes {stable_mosaic.version = 11 : i64} {
  func.func @_mha_self_kernel(%arg0: i32, %arg1: memref<1x8x32xf32, #tpu.memory_space<vmem>>, %arg2: memref<1x8x32xf32, #tpu.memory_space<vmem>>, %arg3: memref<32x64xbf16, #tpu.memory_space<vmem>>, %arg4: memref<1x64xf32, #tpu.memory_space<vmem>>, %arg5: memref<32x32xbf16, #tpu.memory_space<vmem>>, %arg6: memref<1x32xf32, #tpu.memory_space<vmem>>, %arg7: memref<32x32xbf16, #tpu.memory_space<vmem>>, %arg8: memref<1x32xf32, #tpu.memory_space<vmem>>, %arg9: memref<1x8x32xf32, #tpu.memory_space<vmem>>) attributes {dimension_semantics = [#tpu.dimension_semantics<parallel>], iteration_bounds = array<i64: 2>, scalar_prefetch = 0 : i64, scratch_operands = 0 : i64, tpu.core_type = #tpu.core_type<tc>, window_params = [{transform_indices = @transform_0, window_bounds = array<i64: 1, 8, 32>}, {transform_indices = @transform_1, window_bounds = array<i64: 1, 8, 32>}, {pipeline_mode = #tpu.pipeline_mode<synchronous>, transform_indices = @transform_2, window_bounds = array<i64: 32, 64>}, {pipeline_mode = #tpu.pipeline_mode<synchronous>, transform_indices = @transform_3, window_bounds = array<i64: 1, 64>}, {pipeline_mode = #tpu.pipeline_mode<synchronous>, transform_indices = @transform_4, window_bounds = array<i64: 32, 32>}, {pipeline_mode = #tpu.pipeline_mode<synchronous>, transform_indices = @transform_5, window_bounds = array<i64: 1, 32>}, {pipeline_mode = #tpu.pipeline_mode<synchronous>, transform_indices = @transform_6, window_bounds = array<i64: 32, 32>}, {pipeline_mode = #tpu.pipeline_mode<synchronous>, transform_indices = @transform_7, window_bounds = array<i64: 1, 32>}, {transform_indices = @transform_8, window_bounds = array<i64: 1, 8, 32>}]} {
    %c0 = arith.constant 0 : index
    %c0_0 = arith.constant 0 : index
    %c0_1 = arith.constant 0 : index
    %0 = vector.load %arg1[%c0, %c0_0, %c0_1] : memref<1x8x32xf32, #tpu.memory_space<vmem>>, vector<1x8x32xf32>
    %1 = vector.shape_cast %0 : vector<1x8x32xf32> to vector<8x32xf32>
    %2 = arith.truncf %1 : vector<8x32xf32> to vector<8x32xbf16>
    %c0_2 = arith.constant 0 : index
    %c0_3 = arith.constant 0 : index
    %c0_4 = arith.constant 0 : index
    %3 = vector.load %arg2[%c0_2, %c0_3, %c0_4] : memref<1x8x32xf32, #tpu.memory_space<vmem>>, vector<1x8x32xf32>
    %4 = arith.addf %0, %3 : vector<1x8x32xf32>
    %5 = vector.shape_cast %4 : vector<1x8x32xf32> to vector<8x32xf32>
    %6 = arith.truncf %5 : vector<8x32xf32> to vector<8x32xbf16>
    %c0_5 = arith.constant 0 : index
    %c0_6 = arith.constant 0 : index
    %7 = vector.load %arg3[%c0_5, %c0_6] : memref<32x64xbf16, #tpu.memory_space<vmem>>, vector<32x64xbf16>
    %cst = arith.constant dense<0.000000e+00> : vector<8x64xf32>
    %8 = tpu.matmul %6, %7, %cst {dimension_numbers = #tpu.dot_dimension_numbers<[1], [0], [0], [1], [0, 0, 1, 1], [], []>} : vector<8x32xbf16>, vector<32x64xbf16>, vector<8x64xf32> -> vector<8x64xf32>
    %c0_7 = arith.constant 0 : index
    %c0_8 = arith.constant 0 : index
    %9 = vector.load %arg4[%c0_7, %c0_8] : memref<1x64xf32, #tpu.memory_space<vmem>>, vector<1x64xf32>
    %10 = vector.broadcast %9 : vector<1x64xf32> to vector<8x64xf32>
    %11 = arith.addf %8, %10 : vector<8x64xf32>
    %c0_9 = arith.constant 0 : index
    %c0_10 = arith.constant 0 : index
    %12 = vector.load %arg5[%c0_9, %c0_10] : memref<32x32xbf16, #tpu.memory_space<vmem>>, vector<32x32xbf16>
    %cst_11 = arith.constant dense<0.000000e+00> : vector<8x32xf32>
    %13 = tpu.matmul %2, %12, %cst_11 {dimension_numbers = #tpu.dot_dimension_numbers<[1], [0], [0], [1], [0, 0, 1, 1], [], []>} : vector<8x32xbf16>, vector<32x32xbf16>, vector<8x32xf32> -> vector<8x32xf32>
    %c0_12 = arith.constant 0 : index
    %c0_13 = arith.constant 0 : index
    %14 = vector.load %arg6[%c0_12, %c0_13] : memref<1x32xf32, #tpu.memory_space<vmem>>, vector<1x32xf32>
    %15 = vector.broadcast %14 : vector<1x32xf32> to vector<8x32xf32>
    %16 = arith.addf %13, %15 : vector<8x32xf32>
    %17 = vector.extract_strided_slice %11 {offsets = [0, 0], sizes = [8, 32], strides = [1, 1]} : vector<8x64xf32> to vector<8x32xf32>
    %18 = vector.extract_strided_slice %11 {offsets = [0, 32], sizes = [8, 32], strides = [1, 1]} : vector<8x64xf32> to vector<8x32xf32>
    %19 = vector.shape_cast %17 : vector<8x32xf32> to vector<1x8x32xf32>
    %20 = vector.extract_strided_slice %19 {offsets = [0, 0, 0], sizes = [1, 8, 8], strides = [1, 1, 1]} : vector<1x8x32xf32> to vector<1x8x8xf32>
    %21 = vector.extract_strided_slice %19 {offsets = [0, 0, 8], sizes = [1, 8, 8], strides = [1, 1, 1]} : vector<1x8x32xf32> to vector<1x8x8xf32>
    %22 = vector.extract_strided_slice %19 {offsets = [0, 0, 16], sizes = [1, 8, 8], strides = [1, 1, 1]} : vector<1x8x32xf32> to vector<1x8x8xf32>
    %23 = vector.extract_strided_slice %19 {offsets = [0, 0, 24], sizes = [1, 8, 8], strides = [1, 1, 1]} : vector<1x8x32xf32> to vector<1x8x8xf32>
    %24 = vector.shape_cast %20 : vector<1x8x8xf32> to vector<1x1x8x8xf32>
    %25 = vector.shape_cast %21 : vector<1x8x8xf32> to vector<1x1x8x8xf32>
    %26 = vector.shape_cast %22 : vector<1x8x8xf32> to vector<1x1x8x8xf32>
    %27 = vector.shape_cast %23 : vector<1x8x8xf32> to vector<1x1x8x8xf32>
    %28 = tpu.concatenate %24, %25, %26, %27 in 0 : vector<1x1x8x8xf32>, vector<1x1x8x8xf32>, vector<1x1x8x8xf32>, vector<1x1x8x8xf32> -> vector<4x1x8x8xf32>
    %29 = vector.shape_cast %28 : vector<4x1x8x8xf32> to vector<4x8x8xf32>
    %30 = arith.truncf %29 : vector<4x8x8xf32> to vector<4x8x8xbf16>
    %31 = vector.shape_cast %18 : vector<8x32xf32> to vector<1x8x32xf32>
    %32 = vector.extract_strided_slice %31 {offsets = [0, 0, 0], sizes = [1, 8, 8], strides = [1, 1, 1]} : vector<1x8x32xf32> to vector<1x8x8xf32>
    %33 = vector.extract_strided_slice %31 {offsets = [0, 0, 8], sizes = [1, 8, 8], strides = [1, 1, 1]} : vector<1x8x32xf32> to vector<1x8x8xf32>
    %34 = vector.extract_strided_slice %31 {offsets = [0, 0, 16], sizes = [1, 8, 8], strides = [1, 1, 1]} : vector<1x8x32xf32> to vector<1x8x8xf32>
    %35 = vector.extract_strided_slice %31 {offsets = [0, 0, 24], sizes = [1, 8, 8], strides = [1, 1, 1]} : vector<1x8x32xf32> to vector<1x8x8xf32>
    %36 = vector.shape_cast %32 : vector<1x8x8xf32> to vector<1x1x8x8xf32>
    %37 = vector.shape_cast %33 : vector<1x8x8xf32> to vector<1x1x8x8xf32>
    %38 = vector.shape_cast %34 : vector<1x8x8xf32> to vector<1x1x8x8xf32>
    %39 = vector.shape_cast %35 : vector<1x8x8xf32> to vector<1x1x8x8xf32>
    %40 = tpu.concatenate %36, %37, %38, %39 in 0 : vector<1x1x8x8xf32>, vector<1x1x8x8xf32>, vector<1x1x8x8xf32>, vector<1x1x8x8xf32> -> vector<4x1x8x8xf32>
    %41 = vector.shape_cast %40 : vector<4x1x8x8xf32> to vector<4x8x8xf32>
    %42 = arith.truncf %41 : vector<4x8x8xf32> to vector<4x8x8xbf16>
    %43 = vector.shape_cast %16 : vector<8x32xf32> to vector<1x8x32xf32>
    %44 = vector.extract_strided_slice %43 {offsets = [0, 0, 0], sizes = [1, 8, 8], strides = [1, 1, 1]} : vector<1x8x32xf32> to vector<1x8x8xf32>
    %45 = vector.extract_strided_slice %43 {offsets = [0, 0, 8], sizes = [1, 8, 8], strides = [1, 1, 1]} : vector<1x8x32xf32> to vector<1x8x8xf32>
    %46 = vector.extract_strided_slice %43 {offsets = [0, 0, 16], sizes = [1, 8, 8], strides = [1, 1, 1]} : vector<1x8x32xf32> to vector<1x8x8xf32>
    %47 = vector.extract_strided_slice %43 {offsets = [0, 0, 24], sizes = [1, 8, 8], strides = [1, 1, 1]} : vector<1x8x32xf32> to vector<1x8x8xf32>
    %48 = vector.shape_cast %44 : vector<1x8x8xf32> to vector<1x1x8x8xf32>
    %49 = vector.shape_cast %45 : vector<1x8x8xf32> to vector<1x1x8x8xf32>
    %50 = vector.shape_cast %46 : vector<1x8x8xf32> to vector<1x1x8x8xf32>
    %51 = vector.shape_cast %47 : vector<1x8x8xf32> to vector<1x1x8x8xf32>
    %52 = tpu.concatenate %48, %49, %50, %51 in 0 : vector<1x1x8x8xf32>, vector<1x1x8x8xf32>, vector<1x1x8x8xf32>, vector<1x1x8x8xf32> -> vector<4x1x8x8xf32>
    %53 = vector.shape_cast %52 : vector<4x1x8x8xf32> to vector<4x8x8xf32>
    %54 = arith.truncf %53 : vector<4x8x8xf32> to vector<4x8x8xbf16>
    "tpu.trace_start"() <{level = 10 : i32, message = "bld,bmd->blm"}> : () -> ()
    %cst_14 = arith.constant dense<0.000000e+00> : vector<4x8x8xf32>
    %55 = tpu.matmul %30, %42, %cst_14 {dimension_numbers = #tpu.dot_dimension_numbers<[2], [2], [1], [1], [0, 0, 0, 1, 1, 1], [0], [0]>} : vector<4x8x8xbf16>, vector<4x8x8xbf16>, vector<4x8x8xf32> -> vector<4x8x8xf32>
    "tpu.trace_stop"() : () -> ()
    %cst_15 = arith.constant dense<0xFF800000> : vector<4x8xf32>
    %56 = vector.multi_reduction <maximumf>, %55, %cst_15 [2] : vector<4x8x8xf32> to vector<4x8xf32>
    %57 = vector.shape_cast %56 : vector<4x8xf32> to vector<4x8x1xf32>
    %58 = vector.broadcast %57 : vector<4x8x1xf32> to vector<4x8x8xf32>
    %59 = arith.subf %55, %58 : vector<4x8x8xf32>
    %60 = math.exp %59 : vector<4x8x8xf32>
    %cst_16 = arith.constant dense<0.000000e+00> : vector<4x8xf32>
    %61 = vector.multi_reduction <add>, %60, %cst_16 [2] : vector<4x8x8xf32> to vector<4x8xf32>
    %62 = vector.shape_cast %61 : vector<4x8xf32> to vector<4x8x1xf32>
    %63 = tpu.reciprocal %62 {approx = true} : vector<4x8x1xf32> -> vector<4x8x1xf32>
    %64 = vector.broadcast %63 : vector<4x8x1xf32> to vector<4x8x8xf32>
    %65 = arith.mulf %60, %64 : vector<4x8x8xf32>
    %66 = arith.truncf %65 : vector<4x8x8xf32> to vector<4x8x8xbf16>
    "tpu.trace_start"() <{level = 10 : i32, message = "blm,bmd->bld"}> : () -> ()
    %cst_17 = arith.constant dense<0.000000e+00> : vector<4x8x8xf32>
    %67 = tpu.matmul %66, %54, %cst_17 {dimension_numbers = #tpu.dot_dimension_numbers<[2], [1], [1], [2], [0, 0, 0, 1, 1, 2], [0], [0]>} : vector<4x8x8xbf16>, vector<4x8x8xbf16>, vector<4x8x8xf32> -> vector<4x8x8xf32>
    "tpu.trace_stop"() : () -> ()
    %68 = vector.shape_cast %67 : vector<4x8x8xf32> to vector<4x1x8x8xf32>
    %69 = vector.extract_strided_slice %68 {offsets = [0, 0, 0, 0], sizes = [1, 1, 8, 8], strides = [1, 1, 1, 1]} : vector<4x1x8x8xf32> to vector<1x1x8x8xf32>
    %70 = vector.shape_cast %69 : vector<1x1x8x8xf32> to vector<1x8x8xf32>
    %71 = vector.extract_strided_slice %68 {offsets = [1, 0, 0, 0], sizes = [1, 1, 8, 8], strides = [1, 1, 1, 1]} : vector<4x1x8x8xf32> to vector<1x1x8x8xf32>
    %72 = vector.shape_cast %71 : vector<1x1x8x8xf32> to vector<1x8x8xf32>
    %73 = vector.extract_strided_slice %68 {offsets = [2, 0, 0, 0], sizes = [1, 1, 8, 8], strides = [1, 1, 1, 1]} : vector<4x1x8x8xf32> to vector<1x1x8x8xf32>
    %74 = vector.shape_cast %73 : vector<1x1x8x8xf32> to vector<1x8x8xf32>
    %75 = vector.extract_strided_slice %68 {offsets = [3, 0, 0, 0], sizes = [1, 1, 8, 8], strides = [1, 1, 1, 1]} : vector<4x1x8x8xf32> to vector<1x1x8x8xf32>
    %76 = vector.shape_cast %75 : vector<1x1x8x8xf32> to vector<1x8x8xf32>
    %77 = tpu.concatenate %70, %72, %74, %76 in 2 : vector<1x8x8xf32>, vector<1x8x8xf32>, vector<1x8x8xf32>, vector<1x8x8xf32> -> vector<1x8x32xf32>
    %78 = vector.shape_cast %77 : vector<1x8x32xf32> to vector<8x32xf32>
    %79 = arith.truncf %78 : vector<8x32xf32> to vector<8x32xbf16>
    %c0_18 = arith.constant 0 : index
    %c0_19 = arith.constant 0 : index
    %80 = vector.load %arg7[%c0_18, %c0_19] : memref<32x32xbf16, #tpu.memory_space<vmem>>, vector<32x32xbf16>
    %cst_20 = arith.constant dense<0.000000e+00> : vector<8x32xf32>
    %81 = tpu.matmul %79, %80, %cst_20 {dimension_numbers = #tpu.dot_dimension_numbers<[1], [0], [0], [1], [0, 0, 1, 1], [], []>} : vector<8x32xbf16>, vector<32x32xbf16>, vector<8x32xf32> -> vector<8x32xf32>
    %c0_21 = arith.constant 0 : index
    %c0_22 = arith.constant 0 : index
    %82 = vector.load %arg8[%c0_21, %c0_22] : memref<1x32xf32, #tpu.memory_space<vmem>>, vector<1x32xf32>
    %83 = vector.broadcast %82 : vector<1x32xf32> to vector<8x32xf32>
    %84 = arith.addf %81, %83 : vector<8x32xf32>
    %85 = vector.shape_cast %0 : vector<1x8x32xf32> to vector<8x32xf32>
    %86 = arith.addf %85, %84 : vector<8x32xf32>
    %87 = vector.shape_cast %86 : vector<8x32xf32> to vector<1x8x32xf32>
    %c0_23 = arith.constant 0 : index
    %c0_24 = arith.constant 0 : index
    %c0_25 = arith.constant 0 : index
    %88 = vector.load %arg9[%c0_23, %c0_24, %c0_25] : memref<1x8x32xf32, #tpu.memory_space<vmem>>, vector<1x8x32xf32>
    tpu.vector_store %arg9[%c0_23, %c0_24, %c0_25], %87 {strides = array<i32>} : memref<1x8x32xf32, #tpu.memory_space<vmem>>, vector<1x8x32xf32>,
    return
  }
  func.func @transform_0(%arg0: i32) -> (i32, i32, i32) {
    %c0_i32 = arith.constant 0 : i32
    %c0_i32_0 = arith.constant 0 : i32
    %c0_i32_1 = arith.constant 0 : i32
    return %arg0, %c0_i32, %c0_i32_0 : i32, i32, i32
  }
  func.func @transform_1(%arg0: i32) -> (i32, i32, i32) {
    %c0_i32 = arith.constant 0 : i32
    %c0_i32_0 = arith.constant 0 : i32
    %c0_i32_1 = arith.constant 0 : i32
    return %arg0, %c0_i32, %c0_i32_0 : i32, i32, i32
  }
  func.func @transform_2(%arg0: i32) -> (i32, i32) {
    %c0_i32 = arith.constant 0 : i32
    %c0_i32_0 = arith.constant 0 : i32
    %c0_i32_1 = arith.constant 0 : i32
    return %c0_i32, %c0_i32_0 : i32, i32
  }
  func.func @transform_3(%arg0: i32) -> (i32, i32) {
    %c0_i32 = arith.constant 0 : i32
    %c0_i32_0 = arith.constant 0 : i32
    %c0_i32_1 = arith.constant 0 : i32
    return %c0_i32, %c0_i32_0 : i32, i32
  }
  func.func @transform_4(%arg0: i32) -> (i32, i32) {
    %c0_i32 = arith.constant 0 : i32
    %c0_i32_0 = arith.constant 0 : i32
    %c0_i32_1 = arith.constant 0 : i32
    return %c0_i32, %c0_i32_0 : i32, i32
  }
  func.func @transform_5(%arg0: i32) -> (i32, i32) {
    %c0_i32 = arith.constant 0 : i32
    %c0_i32_0 = arith.constant 0 : i32
    %c0_i32_1 = arith.constant 0 : i32
    return %c0_i32, %c0_i32_0 : i32, i32
  }
  func.func @transform_6(%arg0: i32) -> (i32, i32) {
    %c0_i32 = arith.constant 0 : i32
    %c0_i32_0 = arith.constant 0 : i32
    %c0_i32_1 = arith.constant 0 : i32
    return %c0_i32, %c0_i32_0 : i32, i32
  }
  func.func @transform_7(%arg0: i32) -> (i32, i32) {
    %c0_i32 = arith.constant 0 : i32
    %c0_i32_0 = arith.constant 0 : i32
    %c0_i32_1 = arith.constant 0 : i32
    return %c0_i32, %c0_i32_0 : i32, i32
  }
  func.func @transform_8(%arg0: i32) -> (i32, i32, i32) {
    %c0_i32 = arith.constant 0 : i32
    %c0_i32_0 = arith.constant 0 : i32
    %c0_i32_1 = arith.constant 0 : i32
    return %arg0, %c0_i32, %c0_i32_0 : i32, i32, i32
  }
}

module attributes {stable_mosaic.version = 11 : i64} {
  func.func @_mha_self_kernel(%arg0: i32, %arg1: memref<1x8x32xf32, #tpu.memory_space<vmem>>, %arg2: memref<1x8x32xf32, #tpu.memory_space<vmem>>, %arg3: memref<32x64xbf16, #tpu.memory_space<vmem>>, %arg4: memref<1x64xf32, #tpu.memory_space<vmem>>, %arg5: memref<32x32xbf16, #tpu.memory_space<vmem>>, %arg6: memref<1x32xf32, #tpu.memory_space<vmem>>, %arg7: memref<32x32xbf16, #tpu.memory_space<vmem>>, %arg8: memref<1x32xf32, #tpu.memory_space<vmem>>, %arg9: memref<1x8x32xf32, #tpu.memory_space<vmem>>) attributes {dimension_semantics = [#tpu.dimension_semantics<parallel>], iteration_bounds = array<i64: 2>, scalar_prefetch = 0 : i64, scratch_operands = 0 : i64, tpu.core_type = #tpu.core_type<tc>, window_params = [{transform_indices = @transform_0, window_bounds = array<i64: 1, 8, 32>}, {transform_indices = @transform_1, window_bounds = array<i64: 1, 8, 32>}, {pipeline_mode = #tpu.pipeline_mode<synchronous>, transform_indices = @transform_2, window_bounds = array<i64: 32, 64>}, {pipeline_mode = #tpu.pipeline_mode<synchronous>, transform_indices = @transform_3, window_bounds = array<i64: 1, 64>}, {pipeline_mode = #tpu.pipeline_mode<synchronous>, transform_indices = @transform_4, window_bounds = array<i64: 32, 32>}, {pipeline_mode = #tpu.pipeline_mode<synchronous>, transform_indices = @transform_5, window_bounds = array<i64: 1, 32>}, {pipeline_mode = #tpu.pipeline_mode<synchronous>, transform_indices = @transform_6, window_bounds = array<i64: 32, 32>}, {pipeline_mode = #tpu.pipeline_mode<synchronous>, transform_indices = @transform_7, window_bounds = array<i64: 1, 32>}, {transform_indices = @transform_8, window_bounds = array<i64: 1, 8, 32>}]} {
    %c0 = arith.constant 0 : index
    %c0_0 = arith.constant 0 : index
    %c0_1 = arith.constant 0 : index
    %0 = vector.load %arg1[%c0, %c0_0, %c0_1] : memref<1x8x32xf32, #tpu.memory_space<vmem>>, vector<1x8x32xf32>
    %1 = vector.shape_cast %0 : vector<1x8x32xf32> to vector<8x32xf32>
    %2 = arith.truncf %1 : vector<8x32xf32> to vector<8x32xbf16>
    %c0_2 = arith.constant 0 : index
    %c0_3 = arith.constant 0 : index
    %c0_4 = arith.constant 0 : index
    %3 = vector.load %arg2[%c0_2, %c0_3, %c0_4] : memref<1x8x32xf32, #tpu.memory_space<vmem>>, vector<1x8x32xf32>
    %4 = arith.addf %0, %3 : vector<1x8x32xf32>
    %5 = vector.shape_cast %4 : vector<1x8x32xf32> to vector<8x32xf32>
    %6 = arith.truncf %5 : vector<8x32xf32> to vector<8x32xbf16>
    %c0_5 = arith.constant 0 : index
    %c0_6 = arith.constant 0 : index
    %7 = vector.load %arg3[%c0_5, %c0_6] : memref<32x64xbf16, #tpu.memory_space<vmem>>, vector<32x64xbf16>
    %cst = arith.constant dense<0.000000e+00> : vector<8x64xf32>
    %8 = tpu.matmul %6, %7, %cst {dimension_numbers = #tpu.dot_dimension_numbers<[1], [0], [0], [1], [0, 0, 1, 1], [], []>} : vector<8x32xbf16>, vector<32x64xbf16>, vector<8x64xf32> -> vector<8x64xf32>
    %c0_7 = arith.constant 0 : index
    %c0_8 = arith.constant 0 : index
    %9 = vector.load %arg4[%c0_7, %c0_8] : memref<1x64xf32, #tpu.memory_space<vmem>>, vector<1x64xf32>
    %10 = vector.broadcast %9 : vector<1x64xf32> to vector<8x64xf32>
    %11 = arith.addf %8, %10 : vector<8x64xf32>
    %c0_9 = arith.constant 0 : index
    %c0_10 = arith.constant 0 : index
    %12 = vector.load %arg5[%c0_9, %c0_10] : memref<32x32xbf16, #tpu.memory_space<vmem>>, vector<32x32xbf16>
    %cst_11 = arith.constant dense<0.000000e+00> : vector<8x32xf32>
    %13 = tpu.matmul %2, %12, %cst_11 {dimension_numbers = #tpu.dot_dimension_numbers<[1], [0], [0], [1], [0, 0, 1, 1], [], []>} : vector<8x32xbf16>, vector<32x32xbf16>, vector<8x32xf32> -> vector<8x32xf32>
    %c0_12 = arith.constant 0 : index
    %c0_13 = arith.constant 0 : index
    %14 = vector.load %arg6[%c0_12, %c0_13] : memref<1x32xf32, #tpu.memory_space<vmem>>, vector<1x32xf32>
    %15 = vector.broadcast %14 : vector<1x32xf32> to vector<8x32xf32>
    %16 = arith.addf %13, %15 : vector<8x32xf32>
    %17 = vector.extract_strided_slice %11 {offsets = [0, 0], sizes = [8, 32], strides = [1, 1]} : vector<8x64xf32> to vector<8x32xf32>
    %18 = vector.extract_strided_slice %11 {offsets = [0, 32], sizes = [8, 32], strides = [1, 1]} : vector<8x64xf32> to vector<8x32xf32>
    %19 = vector.shape_cast %17 : vector<8x32xf32> to vector<1x8x32xf32>
    %20 = vector.extract_strided_slice %19 {offsets = [0, 0, 0], sizes = [1, 8, 8], strides = [1, 1, 1]} : vector<1x8x32xf32> to vector<1x8x8xf32>
    %21 = vector.extract_strided_slice %19 {offsets = [0, 0, 8], sizes = [1, 8, 8], strides = [1, 1, 1]} : vector<1x8x32xf32> to vector<1x8x8xf32>
    %22 = vector.extract_strided_slice %19 {offsets = [0, 0, 16], sizes = [1, 8, 8], strides = [1, 1, 1]} : vector<1x8x32xf32> to vector<1x8x8xf32>
    %23 = vector.extract_strided_slice %19 {offsets = [0, 0, 24], sizes = [1, 8, 8], strides = [1, 1, 1]} : vector<1x8x32xf32> to vector<1x8x8xf32>
    %24 = vector.shape_cast %20 : vector<1x8x8xf32> to vector<1x1x8x8xf32>
    %25 = vector.shape_cast %21 : vector<1x8x8xf32> to vector<1x1x8x8xf32>
    %26 = vector.shape_cast %22 : vector<1x8x8xf32> to vector<1x1x8x8xf32>
    %27 = vector.shape_cast %23 : vector<1x8x8xf32> to vector<1x1x8x8xf32>
    %28 = tpu.concatenate %24, %25, %26, %27 in 0 : vector<1x1x8x8xf32>, vector<1x1x8x8xf32>, vector<1x1x8x8xf32>, vector<1x1x8x8xf32> -> vector<4x1x8x8xf32>
    %29 = vector.shape_cast %28 : vector<4x1x8x8xf32> to vector<4x8x8xf32>
    %30 = arith.truncf %29 : vector<4x8x8xf32> to vector<4x8x8xbf16>
    %31 = vector.shape_cast %18 : vector<8x32xf32> to vector<1x8x32xf32>
    %32 = vector.extract_strided_slice %31 {offsets = [0, 0, 0], sizes = [1, 8, 8], strides = [1, 1, 1]} : vector<1x8x32xf32> to vector<1x8x8xf32>
    %33 = vector.extract_strided_slice %31 {offsets = [0, 0, 8], sizes = [1, 8, 8], strides = [1, 1, 1]} : vector<1x8x32xf32> to vector<1x8x8xf32>
    %34 = vector.extract_strided_slice %31 {offsets = [0, 0, 16], sizes = [1, 8, 8], strides = [1, 1, 1]} : vector<1x8x32xf32> to vector<1x8x8xf32>
    %35 = vector.extract_strided_slice %31 {offsets = [0, 0, 24], sizes = [1, 8, 8], strides = [1, 1, 1]} : vector<1x8x32xf32> to vector<1x8x8xf32>
    %36 = vector.shape_cast %32 : vector<1x8x8xf32> to vector<1x1x8x8xf32>
    %37 = vector.shape_cast %33 : vector<1x8x8xf32> to vector<1x1x8x8xf32>
    %38 = vector.shape_cast %34 : vector<1x8x8xf32> to vector<1x1x8x8xf32>
    %39 = vector.shape_cast %35 : vector<1x8x8xf32> to vector<1x1x8x8xf32>
    %40 = tpu.concatenate %36, %37, %38, %39 in 0 : vector<1x1x8x8xf32>, vector<1x1x8x8xf32>, vector<1x1x8x8xf32>, vector<1x1x8x8xf32> -> vector<4x1x8x8xf32>
    %41 = vector.shape_cast %40 : vector<4x1x8x8xf32> to vector<4x8x8xf32>
    %42 = arith.truncf %41 : vector<4x8x8xf32> to vector<4x8x8xbf16>
    %43 = vector.shape_cast %16 : vector<8x32xf32> to vector<1x8x32xf32>
    %44 = vector.extract_strided_slice %43 {offsets = [0, 0, 0], sizes = [1, 8, 8], strides = [1, 1, 1]} : vector<1x8x32xf32> to vector<1x8x8xf32>
    %45 = vector.extract_strided_slice %43 {offsets = [0, 0, 8], sizes = [1, 8, 8], strides = [1, 1, 1]} : vector<1x8x32xf32> to vector<1x8x8xf32>
    %46 = vector.extract_strided_slice %43 {offsets = [0, 0, 16], sizes = [1, 8, 8], strides = [1, 1, 1]} : vector<1x8x32xf32> to vector<1x8x8xf32>
    %47 = vector.extract_strided_slice %43 {offsets = [0, 0, 24], sizes = [1, 8, 8], strides = [1, 1, 1]} : vector<1x8x32xf32> to vector<1x8x8xf32>
    %48 = vector.shape_cast %44 : vector<1x8x8xf32> to vector<1x1x8x8xf32>
    %49 = vector.shape_cast %45 : vector<1x8x8xf32> to vector<1x1x8x8xf32>
    %50 = vector.shape_cast %46 : vector<1x8x8xf32> to vector<1x1x8x8xf32>
    %51 = vector.shape_cast %47 : vector<1x8x8xf32> to vector<1x1x8x8xf32>
    %52 = tpu.concatenate %48, %49, %50, %51 in 0 : vector<1x1x8x8xf32>, vector<1x1x8x8xf32>, vector<1x1x8x8xf32>, vector<1x1x8x8xf32> -> vector<4x1x8x8xf32>
    %53 = vector.shape_cast %52 : vector<4x1x8x8xf32> to vector<4x8x8xf32>
    %54 = arith.truncf %53 : vector<4x8x8xf32> to vector<4x8x8xbf16>
    "tpu.trace_start"() <{level = 10 : i32, message = "bld,bmd->blm"}> : () -> ()
    %cst_14 = arith.constant dense<0.000000e+00> : vector<4x8x8xf32>
    %55 = tpu.matmul %30, %42, %cst_14 {dimension_numbers = #tpu.dot_dimension_numbers<[2], [2], [1], [1], [0, 0, 0, 1, 1, 1], [0], [0]>} : vector<4x8x8xbf16>, vector<4x8x8xbf16>, vector<4x8x8xf32> -> vector<4x8x8xf32>
    "tpu.trace_stop"() : () -> ()
    %cst_15 = arith.constant dense<0xFF800000> : vector<4x8xf32>
    %56 = vector.multi_reduction <maximumf>, %55, %cst_15 [2] : vector<4x8x8xf32> to vector<4x8xf32>
    %57 = vector.shape_cast %56 : vector<4x8xf32> to vector<4x8x1xf32>
    %58 = vector.broadcast %57 : vector<4x8x1xf32> to vector<4x8x8xf32>
    %59 = arith.subf %55, %58 : vector<4x8x8xf32>
    %60 = math.exp %59 : vector<4x8x8xf32>
    %cst_16 = arith.constant dense<0.000000e+00> : vector<4x8xf32>
    %61 = vector.multi_reduction <add>, %60, %cst_16 [2] : vector<4x8x8xf32> to vector<4x8xf32>
    %62 = vector.shape_cast %61 : vector<4x8xf32> to vector<4x8x1xf32>
    %63 = tpu.reciprocal %62 {approx = true} : vector<4x8x1xf32> -> vector<4x8x1xf32>
    %64 = vector.broadcast %63 : vector<4x8x1xf32> to vector<4x8x8xf32>
    %65 = arith.mulf %60, %64 : vector<4x8x8xf32>
    %66 = arith.truncf %65 : vector<4x8x8xf32> to vector<4x8x8xbf16>
    "tpu.trace_start"() <{level = 10 : i32, message = "blm,bmd->bld"}> : () -> ()
    %cst_17 = arith.constant dense<0.000000e+00> : vector<4x8x8xf32>
    %67 = tpu.matmul %66, %54, %cst_17 {dimension_numbers = #tpu.dot_dimension_numbers<[2], [1], [1], [2], [0, 0, 0, 1, 1, 2], [0], [0]>} : vector<4x8x8xbf16>, vector<4x8x8xbf16>, vector<4x8x8xf32> -> vector<4x8x8xf32>
    "tpu.trace_stop"() : () -> ()
    %68 = vector.shape_cast %67 : vector<4x8x8xf32> to vector<4x1x8x8xf32>
    %69 = vector.extract_strided_slice %68 {offsets = [0, 0, 0, 0], sizes = [1, 1, 8, 8], strides = [1, 1, 1, 1]} : vector<4x1x8x8xf32> to vector<1x1x8x8xf32>
    %70 = vector.shape_cast %69 : vector<1x1x8x8xf32> to vector<1x8x8xf32>
    %71 = vector.extract_strided_slice %68 {offsets = [1, 0, 0, 0], sizes = [1, 1, 8, 8], strides = [1, 1, 1, 1]} : vector<4x1x8x8xf32> to vector<1x1x8x8xf32>
    %72 = vector.shape_cast %71 : vector<1x1x8x8xf32> to vector<1x8x8xf32>
    %73 = vector.extract_strided_slice %68 {offsets = [2, 0, 0, 0], sizes = [1, 1, 8, 8], strides = [1, 1, 1, 1]} : vector<4x1x8x8xf32> to vector<1x1x8x8xf32>
    %74 = vector.shape_cast %73 : vector<1x1x8x8xf32> to vector<1x8x8xf32>
    %75 = vector.extract_strided_slice %68 {offsets = [3, 0, 0, 0], sizes = [1, 1, 8, 8], strides = [1, 1, 1, 1]} : vector<4x1x8x8xf32> to vector<1x1x8x8xf32>
    %76 = vector.shape_cast %75 : vector<1x1x8x8xf32> to vector<1x8x8xf32>
    %77 = tpu.concatenate %70, %72, %74, %76 in 2 : vector<1x8x8xf32>, vector<1x8x8xf32>, vector<1x8x8xf32>, vector<1x8x8xf32> -> vector<1x8x32xf32>
    %78 = vector.shape_cast %77 : vector<1x8x32xf32> to vector<8x32xf32>
    %79 = arith.truncf %78 : vector<8x32xf32> to vector<8x32xbf16>
    %c0_18 = arith.constant 0 : index
    %c0_19 = arith.constant 0 : index
    %80 = vector.load %arg7[%c0_18, %c0_19] : memref<32x32xbf16, #tpu.memory_space<vmem>>, vector<32x32xbf16>
    %cst_20 = arith.constant dense<0.000000e+00> : vector<8x32xf32>
    %81 = tpu.matmul %79, %80, %cst_20 {dimension_numbers = #tpu.dot_dimension_numbers<[1], [0], [0], [1], [0, 0, 1, 1], [], []>} : vector<8x32xbf16>, vector<32x32xbf16>, vector<8x32xf32> -> vector<8x32xf32>
    %c0_21 = arith.constant 0 : index
    %c0_22 = arith.constant 0 : index
    %82 = vector.load %arg8[%c0_21, %c0_22] : memref<1x32xf32, #tpu.memory_space<vmem>>, vector<1x32xf32>
    %83 = vector.broadcast %82 : vector<1x32xf32> to vector<8x32xf32>
    %84 = arith.addf %81, %83 : vector<8x32xf32>
    %85 = vector.shape_cast %0 : vector<1x8x32xf32> to vector<8x32xf32>
    %86 = arith.addf %85, %84 : vector<8x32xf32>
    %87 = vector.shape_cast %86 : vector<8x32xf32> to vector<1x8x32xf32>
    %c0_23 = arith.constant 0 : index
    %c0_24 = arith.constant 0 : index
    %c0_25 = arith.constant 0 : index
    %88 = vector.load %arg9[%c0_23, %c0_24, %c0_25] : memref<1x8x32xf32, #tpu.memory_space<vmem>>, vector<1x8x32xf32>
    tpu.vector_store %arg9[%c0_23, %c0_24, %c0_25], %87 {strides = array<i32>} : memref<1x8x32xf32, #tpu.memory_space<vmem>>, vector<1x8x32xf32>,
    return
  }
  func.func @transform_0(%arg0: i32) -> (i32, i32, i32) {
    %c0_i32 = arith.constant 0 : i32
    %c0_i32_0 = arith.constant 0 : i32
    %c0_i32_1 = arith.constant 0 : i32
    return %arg0, %c0_i32, %c0_i32_0 : i32, i32, i32
  }
  func.func @transform_1(%arg0: i32) -> (i32, i32, i32) {
    %c0_i32 = arith.constant 0 : i32
    %c0_i32_0 = arith.constant 0 : i32
    %c0_i32_1 = arith.constant 0 : i32
    return %arg0, %c0_i32, %c0_i32_0 : i32, i32, i32
  }
  func.func @transform_2(%arg0: i32) -> (i32, i32) {
    %c0_i32 = arith.constant 0 : i32
    %c0_i32_0 = arith.constant 0 : i32
    %c0_i32_1 = arith.constant 0 : i32
    return %c0_i32, %c0_i32_0 : i32, i32
  }
  func.func @transform_3(%arg0: i32) -> (i32, i32) {
    %c0_i32 = arith.constant 0 : i32
    %c0_i32_0 = arith.constant 0 : i32
    %c0_i32_1 = arith.constant 0 : i32
    return %c0_i32, %c0_i32_0 : i32, i32
  }
  func.func @transform_4(%arg0: i32) -> (i32, i32) {
    %c0_i32 = arith.constant 0 : i32
    %c0_i32_0 = arith.constant 0 : i32
    %c0_i32_1 = arith.constant 0 : i32
    return %c0_i32, %c0_i32_0 : i32, i32
  }
  func.func @transform_5(%arg0: i32) -> (i32, i32) {
    %c0_i32 = arith.constant 0 : i32
    %c0_i32_0 = arith.constant 0 : i32
    %c0_i32_1 = arith.constant 0 : i32
    return %c0_i32, %c0_i32_0 : i32, i32
  }
  func.func @transform_6(%arg0: i32) -> (i32, i32) {
    %c0_i32 = arith.constant 0 : i32
    %c0_i32_0 = arith.constant 0 : i32
    %c0_i32_1 = arith.constant 0 : i32
    return %c0_i32, %c0_i32_0 : i32, i32
  }
  func.func @transform_7(%arg0: i32) -> (i32, i32) {
    %c0_i32 = arith.constant 0 : i32
    %c0_i32_0 = arith.constant 0 : i32
    %c0_i32_1 = arith.constant 0 : i32
    return %c0_i32, %c0_i32_0 : i32, i32
  }
  func.func @transform_8(%arg0: i32) -> (i32, i32, i32) {
    %c0_i32 = arith.constant 0 : i32
    %c0_i32_0 = arith.constant 0 : i32
    %c0_i32_1 = arith.constant 0 : i32
    return %arg0, %c0_i32, %c0_i32_0 : i32, i32, i32
  }
}

</mosaic_0001>

<llo_original>
// kernel: tpu_custom_call.1
$region0: #{tpu_custom_call.1}
  #allocation0 [shape = 'u32[]', space=smem, size = 0x4, offset = 0x4, fixed_abs, tag = 'smem constant byte address 0x4 - core index']
  #allocation1 [shape = 'u32[144,128]{1,0:T(1,128)}', space=vmem, size = 0x12000, scoped, tag = 'internal scratch']
  %s0 = inlined_call_operand.hbm [shape: f32[2,8,32], index: 0, kind: input, shape index: {}]
  %s1 = inlined_call_operand.hbm [shape: f32[2,8,32], index: 1, kind: input, shape index: {}]
  %s2 = inlined_call_operand.hbm [shape: bf16[32,64], index: 2, kind: input, shape index: {}]
  %s3 = inlined_call_operand.vmem [shape: f32[1,64], index: 3, kind: input, shape index: {}]
  %s4 = inlined_call_operand.hbm [shape: bf16[32,32], index: 4, kind: input, shape index: {}]
  %s5 = inlined_call_operand.vmem [shape: f32[1,32], index: 5, kind: input, shape index: {}]
  %s6 = inlined_call_operand.hbm [shape: bf16[32,32], index: 6, kind: input, shape index: {}]
  %s7 = inlined_call_operand.vmem [shape: f32[1,32], index: 7, kind: input, shape index: {}]
  %s8 = inlined_call_operand.hbm [shape: f32[2,8,32], index: 8, kind: output, shape index: {}]
  %s9 = sld [smem:[#allocation0]]
  $region85: #{tpu_custom_call.1} parent=0
    _
  %s11 = ssub.s32 1, %s9
  %s12 = scalar_select 0, %s11, %s9
  $region1: #{tpu_custom_call.1} parent=0
    #allocation2 [shape = 'u8[8192]{0}', space=vmem, size = 0x2000, scoped, tag = 'input window, operand 0']
    #allocation3 [shape = 's32[2]{0}', space=sflag, size = 0x8, scoped, tag = 'scoped memory for tpu_custom_call.1']
    #allocation4 [shape = 's32[2]{0}', space=sflag, size = 0x8, scoped, tag = 'scoped memory for tpu_custom_call.1']
    #allocation5 [shape = 'u8[8192]{0}', space=vmem, size = 0x2000, scoped, tag = 'input window, operand 1']
    #allocation6 [shape = 's32[2]{0}', space=sflag, size = 0x8, scoped, tag = 'scoped memory for tpu_custom_call.1']
    #allocation7 [shape = 'u8[8192]{0}', space=vmem, size = 0x2000, scoped, tag = 'input window, operand 2, single buffered']
    #allocation8 [shape = 'u8[8192]{0}', space=vmem, size = 0x2000, scoped, tag = 'input window, operand 4, single buffered']
    #allocation9 [shape = 's32[1]{0}', space=sflag, size = 0x4, scoped, tag = 'scoped memory for tpu_custom_call.1']
    #allocation10 [shape = 'u8[8192]{0}', space=vmem, size = 0x2000, scoped, tag = 'input window, operand 6, single buffered']
    #allocation11 [shape = 'u8[8192]{0}', space=vmem, size = 0x2000, scoped, tag = 'output window, operand 0']
    %13 = vsyncpa [#allocation3], 0
    %s14 = scalar_lea.sflag [#allocation3], 1
    %15 = vsyncpa %s14, 0
    %16 = vsyncpa [#allocation6], 0
    %s17 = scalar_lea.sflag [#allocation6], 1
    %18 = vsyncpa %s17, 0
    %19 = vsyncpa [#allocation9], 0
    %20 = vsyncpa [#allocation4], 0
    %s21 = scalar_lea.sflag [#allocation4], 1
    %22 = vsyncpa %s21, 0
    loop: start=0, step=1, limit=4
    $region2: #{tpu_custom_call.1} parent=1 // loop_pre_header
      _
    $region3: #{tpu_custom_call.1} parent=1 // loop_header
      %s24 = sphi 0, %s28
      %p25 = scmp.ge.s32.totalorder %s24, 4
      %s34 = sphi 0, %s36
      %s37 = sphi 0, %s34
      %s38 = sphi 0, %s37
      %s54 = sphi 0, %s38
      %s60 = sphi 0, %s62
      %s63 = sphi 0, %s60
      %s64 = sphi 0, %s63
      %s80 = sphi 0, %s64
      %s84 = sphi 0, %s84
      %s86 = sphi 0, %s84
      %s87 = sphi 0, %s86
      %s101 = sphi 0, %s87
      %s105 = sphi 0, %s105
      %s107 = sphi 0, %s105
      %s108 = sphi 0, %s107
      %s122 = sphi 0, %s108
      %s126 = sphi 0, %s126
      %s128 = sphi 0, %s126
      %s129 = sphi 0, %s128
      %s143 = sphi 0, %s129
      %s147 = sphi 0, %s147
      %s149 = sphi 0, %s147
      %s150 = sphi 0, %s149
      %s164 = sphi 0, %s150
      %s168 = sphi 0, %s168
      %s170 = sphi 0, %s168
      %s171 = sphi 0, %s170
      %s185 = sphi 0, %s171
      %s189 = sphi 0, %s189
      %s191 = sphi 0, %s189
      %s192 = sphi 0, %s191
      %s206 = sphi 0, %s192
      %s212 = sphi 0, %s214
      %s215 = sphi 0, %s212
      %s216 = sphi 0, %s215
      %s232 = sphi 0, %s216
    $region4: #{tpu_custom_call.1} parent=1 // loop_header_branch
      %27 = sbr.rel (%p25) target = $region8
    $region5: #{tpu_custom_call.1} parent=1 // loop_body
      %s29 = ssub.s32 %s24, 1
      %s30 = ssub.s32 %s24, 2
      %s31 = sadd.s32 %s24, 1
      %s32 = ssub.s32 %s24, %s31
      %p33 = scmp.eq.s32.totalorder %s32, 0
      %s35 = sadd.s32 %s34, 1
      %s36 = scalar_select %p33, %s34, %s35
      %p39 = pneg %p33
      %p40 = scmp.eq.s32.totalorder %s24, 1
      %p41 = por %p39, %p40
      %p42 = scmp.ne.s32.totalorder %s34, %s37
      %p43 = scmp.eq.s32.totalorder %s24, 0
      %p44 = por %p42, %p43
      %p45 = scmp.ne.s32.totalorder %s34, %s37
      %p46 = scmp.eq.s32.totalorder %s29, 1
      %p47 = por %p45, %p46
      %p48 = scmp.ne.s32.totalorder %s37, %s38
      %p49 = scmp.eq.s32.totalorder %s29, 0
      %p50 = por %p48, %p49
      %p51 = scmp.ne.s32.totalorder %s37, %s38
      %p52 = scmp.eq.s32.totalorder %s30, 1
      %p53 = por %p51, %p52
      %p55 = scmp.ne.s32.totalorder %s38, %s54
      %p56 = scmp.eq.s32.totalorder %s30, 0
      %p57 = por %p55, %p56
      %s58 = ssub.s32 %s24, %s31
      %p59 = scmp.eq.s32.totalorder %s58, 0
      %s61 = sadd.s32 %s60, 1
      %s62 = scalar_select %p59, %s60, %s61
      %p65 = pneg %p59
      %p66 = scmp.eq.s32.totalorder %s24, 1
      %p67 = por %p65, %p66
      %p68 = scmp.ne.s32.totalorder %s60, %s63
      %p69 = scmp.eq.s32.totalorder %s24, 0
      %p70 = por %p68, %p69
      %p71 = scmp.ne.s32.totalorder %s60, %s63
      %p72 = scmp.eq.s32.totalorder %s29, 1
      %p73 = por %p71, %p72
      %p74 = scmp.ne.s32.totalorder %s63, %s64
      %p75 = scmp.eq.s32.totalorder %s29, 0
      %p76 = por %p74, %p75
      %p77 = scmp.ne.s32.totalorder %s63, %s64
      %p78 = scmp.eq.s32.totalorder %s30, 1
      %p79 = por %p77, %p78
      %p81 = scmp.ne.s32.totalorder %s64, %s80
      %p82 = scmp.eq.s32.totalorder %s30, 0
      %p83 = por %p81, %p82
      %s85 = sadd.s32 %s84, 1
      %p88 = scmp.eq.s32.totalorder %s24, 1
      %p89 = scmp.ne.s32.totalorder %s84, %s86
      %p90 = scmp.eq.s32.totalorder %s24, 0
      %p91 = por %p89, %p90
      %p92 = scmp.ne.s32.totalorder %s84, %s86
      %p93 = scmp.eq.s32.totalorder %s29, 1
      %p94 = por %p92, %p93
      %p95 = scmp.ne.s32.totalorder %s86, %s87
      %p96 = scmp.eq.s32.totalorder %s29, 0
      %p97 = por %p95, %p96
      %p98 = scmp.ne.s32.totalorder %s86, %s87
      %p99 = scmp.eq.s32.totalorder %s30, 1
      %p100 = por %p98, %p99
      %p102 = scmp.ne.s32.totalorder %s87, %s101
      %p103 = scmp.eq.s32.totalorder %s30, 0
      %p104 = por %p102, %p103
      %s106 = sadd.s32 %s105, 1
      %p109 = scmp.eq.s32.totalorder %s24, 1
      %p110 = scmp.ne.s32.totalorder %s105, %s107
      %p111 = scmp.eq.s32.totalorder %s24, 0
      %p112 = por %p110, %p111
      %p113 = scmp.ne.s32.totalorder %s105, %s107
      %p114 = scmp.eq.s32.totalorder %s29, 1
      %p115 = por %p113, %p114
      %p116 = scmp.ne.s32.totalorder %s107, %s108
      %p117 = scmp.eq.s32.totalorder %s29, 0
      %p118 = por %p116, %p117
      %p119 = scmp.ne.s32.totalorder %s107, %s108
      %p120 = scmp.eq.s32.totalorder %s30, 1
      %p121 = por %p119, %p120
      %p123 = scmp.ne.s32.totalorder %s108, %s122
      %p124 = scmp.eq.s32.totalorder %s30, 0
      %p125 = por %p123, %p124
      %s127 = sadd.s32 %s126, 1
      %p130 = scmp.eq.s32.totalorder %s24, 1
      %p131 = scmp.ne.s32.totalorder %s126, %s128
      %p132 = scmp.eq.s32.totalorder %s24, 0
      %p133 = por %p131, %p132
      %p134 = scmp.ne.s32.totalorder %s126, %s128
      %p135 = scmp.eq.s32.totalorder %s29, 1
      %p136 = por %p134, %p135
      %p137 = scmp.ne.s32.totalorder %s128, %s129
      %p138 = scmp.eq.s32.totalorder %s29, 0
      %p139 = por %p137, %p138
      %p140 = scmp.ne.s32.totalorder %s128, %s129
      %p141 = scmp.eq.s32.totalorder %s30, 1
      %p142 = por %p140, %p141
      %p144 = scmp.ne.s32.totalorder %s129, %s143
      %p145 = scmp.eq.s32.totalorder %s30, 0
      %p146 = por %p144, %p145
      %s148 = sadd.s32 %s147, 1
      %p151 = scmp.eq.s32.totalorder %s24, 1
      %p152 = scmp.ne.s32.totalorder %s147, %s149
      %p153 = scmp.eq.s32.totalorder %s24, 0
      %p154 = por %p152, %p153
      %p155 = scmp.ne.s32.totalorder %s147, %s149
      %p156 = scmp.eq.s32.totalorder %s29, 1
      %p157 = por %p155, %p156
      %p158 = scmp.ne.s32.totalorder %s149, %s150
      %p159 = scmp.eq.s32.totalorder %s29, 0
      %p160 = por %p158, %p159
      %p161 = scmp.ne.s32.totalorder %s149, %s150
      %p162 = scmp.eq.s32.totalorder %s30, 1
      %p163 = por %p161, %p162
      %p165 = scmp.ne.s32.totalorder %s150, %s164
      %p166 = scmp.eq.s32.totalorder %s30, 0
      %p167 = por %p165, %p166
      %s169 = sadd.s32 %s168, 1
      %p172 = scmp.eq.s32.totalorder %s24, 1
      %p173 = scmp.ne.s32.totalorder %s168, %s170
      %p174 = scmp.eq.s32.totalorder %s24, 0
      %p175 = por %p173, %p174
      %p176 = scmp.ne.s32.totalorder %s168, %s170
      %p177 = scmp.eq.s32.totalorder %s29, 1
      %p178 = por %p176, %p177
      %p179 = scmp.ne.s32.totalorder %s170, %s171
      %p180 = scmp.eq.s32.totalorder %s29, 0
      %p181 = por %p179, %p180
      %p182 = scmp.ne.s32.totalorder %s170, %s171
      %p183 = scmp.eq.s32.totalorder %s30, 1
      %p184 = por %p182, %p183
      %p186 = scmp.ne.s32.totalorder %s171, %s185
      %p187 = scmp.eq.s32.totalorder %s30, 0
      %p188 = por %p186, %p187
      %s190 = sadd.s32 %s189, 1
      %p193 = scmp.eq.s32.totalorder %s24, 1
      %p194 = scmp.ne.s32.totalorder %s189, %s191
      %p195 = scmp.eq.s32.totalorder %s24, 0
      %p196 = por %p194, %p195
      %p197 = scmp.ne.s32.totalorder %s189, %s191
      %p198 = scmp.eq.s32.totalorder %s29, 1
      %p199 = por %p197, %p198
      %p200 = scmp.ne.s32.totalorder %s191, %s192
      %p201 = scmp.eq.s32.totalorder %s29, 0
      %p202 = por %p200, %p201
      %p203 = scmp.ne.s32.totalorder %s191, %s192
      %p204 = scmp.eq.s32.totalorder %s30, 1
      %p205 = por %p203, %p204
      %p207 = scmp.ne.s32.totalorder %s192, %s206
      %p208 = scmp.eq.s32.totalorder %s30, 0
      %p209 = por %p207, %p208
      %s210 = ssub.s32 %s24, %s31
      %p211 = scmp.eq.s32.totalorder %s210, 0
      %s213 = sadd.s32 %s212, 1
      %s214 = scalar_select %p211, %s212, %s213
      %p217 = pneg %p211
      %p218 = scmp.eq.s32.totalorder %s24, 1
      %p219 = por %p217, %p218
      %p220 = scmp.ne.s32.totalorder %s212, %s215
      %p221 = scmp.eq.s32.totalorder %s24, 0
      %p222 = por %p220, %p221
      %p223 = scmp.ne.s32.totalorder %s212, %s215
      %p224 = scmp.eq.s32.totalorder %s29, 1
      %p225 = por %p223, %p224
      %p226 = scmp.ne.s32.totalorder %s215, %s216
      %p227 = scmp.eq.s32.totalorder %s29, 0
      %p228 = por %p226, %p227
      %p229 = scmp.ne.s32.totalorder %s215, %s216
      %p230 = scmp.eq.s32.totalorder %s30, 1
      %p231 = por %p229, %p230
      %p233 = scmp.ne.s32.totalorder %s216, %s232
      %p234 = scmp.eq.s32.totalorder %s30, 0
      %p235 = por %p233, %p234
      %p236 = scmp.le.s32.totalorder 1, %s24
      %p237 = scmp.lt.s32.totalorder %s24, 3
      %p238 = pnand %p236, %p237
      %p239 = pneg %p238
      // Predicated region
      $region9: #{tpu_custom_call.1} parent=5 // pred_check
        _
      $region10: #{tpu_custom_call.1} parent=5 // pred_check_branch
        %241 = sbr.rel (%p238) target = $region12
      $region11: #{tpu_custom_call.1} parent=5 // pred_region
        %s242 = ssub.s32 %s24, 1
        // Predicated region
        $region13: #{tpu_custom_call.1} parent=11 // pred_check
          %p243 = pneg %p97
        $region14: #{tpu_custom_call.1} parent=11 // pred_check_branch
          %245 = sbr.rel (%p243) target = $region16
        $region15: #{tpu_custom_call.1} parent=11 // pred_region
          %s247 = ssub.s32 256, 256
          %248 = vsyncadd [#allocation6], %s247
          %s249 = sshll.u32 [#allocation7], 4
          %s250 = int_to_ptr.vmem [resolvable:$true] %s249
          %255 = dma.hbm_to_vmem [thread:$0]  %s2, 256, %s250, [#allocation6], 64, 64, 4
        $region16: #{tpu_custom_call.1} parent=11 // pred_fallthru
          _
        // Predicated region
        $region17: #{tpu_custom_call.1} parent=11 // pred_check
          %p256 = pneg %p118
        $region18: #{tpu_custom_call.1} parent=11 // pred_check_branch
          %258 = sbr.rel (%p256) target = $region20
        $region19: #{tpu_custom_call.1} parent=11 // pred_region
          _
        $region20: #{tpu_custom_call.1} parent=11 // pred_fallthru
          _
        // Predicated region
        $region21: #{tpu_custom_call.1} parent=11 // pred_check
          %p259 = pneg %p139
        $region22: #{tpu_custom_call.1} parent=11 // pred_check_branch
          %261 = sbr.rel (%p259) target = $region24
        $region23: #{tpu_custom_call.1} parent=11 // pred_region
          %s263 = ssub.s32 256, 256
          %264 = vsyncadd [#allocation9], %s263
          %s265 = sshll.u32 [#allocation8], 4
          %s266 = int_to_ptr.vmem [resolvable:$true] %s265
          %271 = dma.hbm_to_vmem [thread:$0]  %s4, 256, %s266, [#allocation9], 64, 64, 4
        $region24: #{tpu_custom_call.1} parent=11 // pred_fallthru
          _
        // Predicated region
        $region25: #{tpu_custom_call.1} parent=11 // pred_check
          %p272 = pneg %p160
        $region26: #{tpu_custom_call.1} parent=11 // pred_check_branch
          %274 = sbr.rel (%p272) target = $region28
        $region27: #{tpu_custom_call.1} parent=11 // pred_region
          _
        $region28: #{tpu_custom_call.1} parent=11 // pred_fallthru
          _
        // Predicated region
        $region29: #{tpu_custom_call.1} parent=11 // pred_check
          %p275 = pneg %p181
        $region30: #{tpu_custom_call.1} parent=11 // pred_check_branch
          %277 = sbr.rel (%p275) target = $region32
        $region31: #{tpu_custom_call.1} parent=11 // pred_region
          %s279 = ssub.s32 256, 256
          %280 = vsyncadd [#allocation9], %s279
          %s281 = sshll.u32 [#allocation10], 4
          %s282 = int_to_ptr.vmem [resolvable:$true] %s281
          %287 = dma.hbm_to_vmem [thread:$0]  %s6, 256, %s282, [#allocation9], 64, 64, 4
        $region32: #{tpu_custom_call.1} parent=11 // pred_fallthru
          _
        // Predicated region
        $region33: #{tpu_custom_call.1} parent=11 // pred_check
          %p288 = pneg %p202
        $region34: #{tpu_custom_call.1} parent=11 // pred_check_branch
          %290 = sbr.rel (%p288) target = $region36
        $region35: #{tpu_custom_call.1} parent=11 // pred_region
          _
        $region36: #{tpu_custom_call.1} parent=11 // pred_fallthru
          _
      $region12: #{tpu_custom_call.1} parent=5 // pred_fallthru
        _
      %p291 = scmp.lt.s32.totalorder %s24, 2
      // Predicated region
      $region37: #{tpu_custom_call.1} parent=5 // pred_check
        %p292 = pneg %p291
      $region38: #{tpu_custom_call.1} parent=5 // pred_check_branch
        %294 = sbr.rel (%p292) target = $region40
      $region39: #{tpu_custom_call.1} parent=5 // pred_region
        // Predicated region
        $region41: #{tpu_custom_call.1} parent=39 // pred_check
          %p295 = pneg %p44
        $region42: #{tpu_custom_call.1} parent=39 // pred_check_branch
          %297 = sbr.rel (%p295) target = $region44
        $region43: #{tpu_custom_call.1} parent=39 // pred_region
          %s298 = sand.u32 %s34, 1
          %s299 = scalar_lea.sflag [#allocation3], %s298
          %s300 = sand.u32 %s34, 1
          %s301 = smul.addr %s300, 8
          %s302 = scalar_lea.vmem [#allocation2], %s301
          %s304 = ssub.s32 128, 128
          %305 = vsyncadd %s299, %s304
          %s306 = smul.addr %s24, 128
          %s307 = scalar_lea.hbm %s0, %s306
          %s309 = sshll.u32 %s302, 4
          %s310 = int_to_ptr.vmem [resolvable:$true] %s309
          %312 = dma.hbm_to_vmem [thread:$0]  %s307, 128, %s310, %s299
        $region44: #{tpu_custom_call.1} parent=39 // pred_fallthru
          _
        // Predicated region
        $region45: #{tpu_custom_call.1} parent=39 // pred_check
          %p313 = pneg %p70
        $region46: #{tpu_custom_call.1} parent=39 // pred_check_branch
          %315 = sbr.rel (%p313) target = $region48
        $region47: #{tpu_custom_call.1} parent=39 // pred_region
          %s316 = sand.u32 %s24, 1
          %s317 = scalar_lea.sflag [#allocation6], %s316
          %s318 = sand.u32 %s60, 1
          %s319 = smul.addr %s318, 8
          %s320 = scalar_lea.vmem [#allocation5], %s319
          %s322 = ssub.s32 128, 128
          %323 = vsyncadd %s317, %s322
          %s324 = smul.addr %s24, 128
          %s325 = scalar_lea.hbm %s1, %s324
          %s327 = sshll.u32 %s320, 4
          %s328 = int_to_ptr.vmem [resolvable:$true] %s327
          %330 = dma.hbm_to_vmem [thread:$0]  %s325, 128, %s328, %s317
        $region48: #{tpu_custom_call.1} parent=39 // pred_fallthru
          _
      $region40: #{tpu_custom_call.1} parent=5 // pred_fallthru
        _
      %p331 = scmp.le.s32.totalorder 1, %s24
      %p332 = scmp.lt.s32.totalorder %s24, 3
      %p333 = pnand %p331, %p332
      %p334 = pneg %p333
      // Predicated region
      $region49: #{tpu_custom_call.1} parent=5 // pred_check
        _
      $region50: #{tpu_custom_call.1} parent=5 // pred_check_branch
        %336 = sbr.rel (%p333) target = $region52
      $region51: #{tpu_custom_call.1} parent=5 // pred_region
        %s337 = ssub.s32 %s24, 1
        %s338 = sand.u32 %s37, 1
        %s339 = scalar_lea.sflag [#allocation3], %s338
        %s340 = sand.u32 %s37, 1
        %s341 = smul.addr %s340, 8
        %s342 = scalar_lea.vmem [#allocation2], %s341
        // Predicated region
        $region53: #{tpu_custom_call.1} parent=51 // pred_check
          %p343 = pneg %p50
        $region54: #{tpu_custom_call.1} parent=51 // pred_check_branch
          %345 = sbr.rel (%p343) target = $region56
        $region55: #{tpu_custom_call.1} parent=51 // pred_region
          %346 = dma.done %s339, 128
        $region56: #{tpu_custom_call.1} parent=51 // pred_fallthru
          _
        %s347 = sand.u32 %s29, 1
        %s348 = scalar_lea.sflag [#allocation6], %s347
        %s349 = sand.u32 %s63, 1
        %s350 = smul.addr %s349, 8
        %s351 = scalar_lea.vmem [#allocation5], %s350
        // Predicated region
        $region57: #{tpu_custom_call.1} parent=51 // pred_check
          %p352 = pneg %p76
        $region58: #{tpu_custom_call.1} parent=51 // pred_check_branch
          %354 = sbr.rel (%p352) target = $region60
        $region59: #{tpu_custom_call.1} parent=51 // pred_region
          %355 = dma.done %s348, 128
        $region60: #{tpu_custom_call.1} parent=51 // pred_fallthru
          _
        // Predicated region
        $region61: #{tpu_custom_call.1} parent=51 // pred_check
          %p356 = pneg %p97
        $region62: #{tpu_custom_call.1} parent=51 // pred_check_branch
          %358 = sbr.rel (%p356) target = $region64
        $region63: #{tpu_custom_call.1} parent=51 // pred_region
          %359 = dma.done [#allocation6], 256
        $region64: #{tpu_custom_call.1} parent=51 // pred_fallthru
          _
        // Predicated region
        $region65: #{tpu_custom_call.1} parent=51 // pred_check
          %p360 = pneg %p139
        $region66: #{tpu_custom_call.1} parent=51 // pred_check_branch
          %362 = sbr.rel (%p360) target = $region68
        $region67: #{tpu_custom_call.1} parent=51 // pred_region
          %363 = dma.done [#allocation9], 256
        $region68: #{tpu_custom_call.1} parent=51 // pred_fallthru
          _
        // Predicated region
        $region69: #{tpu_custom_call.1} parent=51 // pred_check
          %p364 = pneg %p181
        $region70: #{tpu_custom_call.1} parent=51 // pred_check_branch
          %366 = sbr.rel (%p364) target = $region72
        $region71: #{tpu_custom_call.1} parent=51 // pred_region
          %367 = dma.done [#allocation9], 256
        $region72: #{tpu_custom_call.1} parent=51 // pred_fallthru
          _
        %s368 = sand.u32 %s37, 1
        %s369 = scalar_lea.sflag [#allocation3], %s368
        %s370 = sand.u32 %s37, 1
        %s371 = smul.addr %s370, 8
        %s372 = scalar_lea.vmem [#allocation2], %s371
        %p373 = pneg %p50
        %p374 = pneg %p47
        %s375 = sand.u32 %s29, 1
        %s376 = scalar_lea.sflag [#allocation6], %s375
        %s377 = sand.u32 %s63, 1
        %s378 = smul.addr %s377, 8
        %s379 = scalar_lea.vmem [#allocation5], %s378
        %p380 = pneg %p76
        %p381 = pneg %p73
        %p382 = pneg %p97
        %p383 = pneg %p94
        %p384 = pneg %p118
        %p385 = pneg %p115
        %p386 = pneg %p139
        %p387 = pneg %p136
        %p388 = pneg %p160
        %p389 = pneg %p157
        %p390 = pneg %p181
        %p391 = pneg %p178
        %p392 = pneg %p202
        %p393 = pneg %p199
        %p394 = pneg %p228
        %p395 = pneg %p225
        %s396 = sand.u32 %s215, 1
        %s397 = scalar_lea.sflag [#allocation4], %s396
        %s398 = sand.u32 %s215, 1
        %s399 = smul.addr %s398, 8
        %s400 = scalar_lea.vmem [#allocation11], %s399
        %v402 = vld [vmem:[%s342] sm:$0xff]
        %v403 = vpack.c.bf16 %v402, %v402
        %v404 = vld [vmem:[%s351] sm:$0xff]
        %v405 = vadd.f32 %v402, %v404
        %v406 = vpack.c.bf16 %v405, %v405
        %v407 = vld [vmem:[#allocation7] sm:$0xf]
        %v408 = vld [vmem:[#allocation7 + $0x4] sm:$0xf]
        %v409 = vld [vmem:[#allocation7 + $0x8] sm:$0xf]
        %v410 = vld [vmem:[#allocation7 + $0xc] sm:$0xf]
        %v411 = vld [vmem:[%s3] sm:$0x1]
        %v413 = vlaneseq
        %v414 = vshrl.u32 %v413, 7
        %v415 = vsub.s32 0, %v414
        %v416 = vrot.slane %v411, %v415
        %v422 = vunpack.c.l.b16 %v407
        %v423 = vunpack.c.l.b16 %v408
        %v424 = vunpack.c.l.b16 %v409
        %v425 = vunpack.c.l.b16 %v410
        %v426 = vpack.c.b16 %v423, %v422
        %v427 = vpack.c.b16 %v425, %v424
        %vm430 = vcmask 261120
        %v432 = vsel %vm430, %v406, 0
        %434 = vmatprep.subr.bf16.mxu0 0
        %435 = vmatpush1.bf16.msra.mxu0 0
        %436 = vmatprep.subr.bf16.mxu0 0
        %437 = vmatpush1.bf16.msra.mxu0 0
        %438 = vmatprep.subr.bf16.mxu0 0
        %439 = vmatpush1.bf16.msra.mxu0 0
        %440 = vmatprep.subr.bf16.mxu0 0
        %441 = vmatpush1.bf16.msra.mxu0 0
        %442 = vmatprep.subr.bf16.mxu0 0
        %443 = vmatpush1.bf16.msra.mxu0 0
        %444 = vmatprep.subr.bf16.mxu0 0
        %445 = vmatpush1.bf16.msra.mxu0 0
        %446 = vmatprep.subr.bf16.mxu0 0
        %447 = vmatpush1.bf16.msra.mxu0 %v427
        %448 = vmatprep.subr.bf16.mxu0 0
        %449 = vmatpush1.bf16.msra.mxu0 %v426
        %450 = vmatprep.subr.bf16.mxu0 0
        %451 = vmatpush2.bf16.msra.mxu0 0
        %452 = vmatprep.subr.bf16.mxu0 0
        %453 = vmatpush2.bf16.msra.mxu0 0
        %454 = vmatprep.subr.bf16.mxu0 0
        %455 = vmatpush2.bf16.msra.mxu0 0
        %456 = vmatprep.subr.bf16.mxu0 0
        %457 = vmatpush2.bf16.msra.mxu0 0
        %458 = vmatprep.subr.bf16.mxu0 0
        %459 = vmatpush2.bf16.msra.mxu0 0
        %460 = vmatprep.subr.bf16.mxu0 0
        %461 = vmatpush2.bf16.msra.mxu0 0
        %462 = vmatprep.subr.bf16.mxu0 0
        %463 = vmatpush2.bf16.msra.mxu0 0
        %464 = vmatprep.subr.bf16.mxu0 0
        %465 = vmatpush2.bf16.msra.mxu0 0
        %466 = vmatprep.mubr.bf16.mxu0 0
        %467 = vmatmul.mubr.bf16.gmra.mxu0 %v432
        %v468 = vpop.f32.mrf.mxu0
        %v469 = vadd.f32 %v416, %v468
        %v470 = vpop.f32.mrf.mxu0
        %v471 = vpop.f32.mrf.mxu0
        %v472 = vpop.f32.mrf.mxu0
        %473 = vdwg.mxu0
        %v474 = vld [vmem:[#allocation8] sm:$0xf]
        %v475 = vld [vmem:[#allocation8 + $0x4] sm:$0xf]
        %v476 = vld [vmem:[#allocation8 + $0x8] sm:$0xf]
        %v477 = vld [vmem:[#allocation8 + $0xc] sm:$0xf]
        %v478 = vld [vmem:[%s5] sm:$0x1]
        %v480 = vlaneseq
        %v481 = vshrl.u32 %v480, 7
        %v482 = vsub.s32 0, %v481
        %v483 = vrot.slane %v478, %v482
        %v489 = vunpack.c.l.b16 %v474
        %v490 = vunpack.c.l.b16 %v475
        %v491 = vunpack.c.l.b16 %v476
        %v492 = vunpack.c.l.b16 %v477
        %v493 = vpack.c.b16 %v490, %v489
        %v494 = vpack.c.b16 %v492, %v491
        %v498 = vsel %vm430, %v403, 0
        %500 = vmatprep.subr.bf16.mxu0 0
        %501 = vmatpush1.bf16.msra.mxu0 0
        %502 = vmatprep.subr.bf16.mxu0 0
        %503 = vmatpush1.bf16.msra.mxu0 0
        %504 = vmatprep.subr.bf16.mxu0 0
        %505 = vmatpush1.bf16.msra.mxu0 0
        %506 = vmatprep.subr.bf16.mxu0 0
        %507 = vmatpush1.bf16.msra.mxu0 0
        %508 = vmatprep.subr.bf16.mxu0 0
        %509 = vmatpush1.bf16.msra.mxu0 0
        %510 = vmatprep.subr.bf16.mxu0 0
        %511 = vmatpush1.bf16.msra.mxu0 0
        %512 = vmatprep.subr.bf16.mxu0 0
        %513 = vmatpush1.bf16.msra.mxu0 %v494
        %514 = vmatprep.subr.bf16.mxu0 0
        %515 = vmatpush1.bf16.msra.mxu0 %v493
        %516 = vmatprep.subr.bf16.mxu0 0
        %517 = vmatpush2.bf16.msra.mxu0 0
        %518 = vmatprep.subr.bf16.mxu0 0
        %519 = vmatpush2.bf16.msra.mxu0 0
        %520 = vmatprep.subr.bf16.mxu0 0
        %521 = vmatpush2.bf16.msra.mxu0 0
        %522 = vmatprep.subr.bf16.mxu0 0
        %523 = vmatpush2.bf16.msra.mxu0 0
        %524 = vmatprep.subr.bf16.mxu0 0
        %525 = vmatpush2.bf16.msra.mxu0 0
        %526 = vmatprep.subr.bf16.mxu0 0
        %527 = vmatpush2.bf16.msra.mxu0 0
        %528 = vmatprep.subr.bf16.mxu0 0
        %529 = vmatpush2.bf16.msra.mxu0 0
        %530 = vmatprep.subr.bf16.mxu0 0
        %531 = vmatpush2.bf16.msra.mxu0 0
        %532 = vmatprep.mubr.bf16.mxu0 0
        %533 = vmatmul.mubr.bf16.gmra.mxu0 %v498
        %v534 = vpop.f32.mrf.mxu0
        %v535 = vadd.f32 %v483, %v534
        %v536 = vpop.f32.mrf.mxu0
        %v537 = vpop.f32.mrf.mxu0
        %v538 = vpop.f32.mrf.mxu0
        %539 = vdwg.mxu0
        %541 = vrot.lane.b32.xlu0 %v469, 120
        %v542 = vpop.permute.xlu0 %541
        %544 = vrot.lane.b32.xlu0 %v469, 112
        %v545 = vpop.permute.xlu0 %544
        %547 = vrot.lane.b32.xlu0 %v469, 104
        %v548 = vpop.permute.xlu0 %547
        %v550 = vpack.c.bf16 %v469, %v469
        %v551 = vpack.c.bf16 %v542, %v542
        %v552 = vpack.c.bf16 %v545, %v545
        %v553 = vpack.c.bf16 %v548, %v548
        %555 = vrot.lane.b32.xlu0 %v535, 120
        %v556 = vpop.permute.xlu0 %555
        %558 = vrot.lane.b32.xlu0 %v535, 112
        %v559 = vpop.permute.xlu0 %558
        %561 = vrot.lane.b32.xlu0 %v535, 104
        %v562 = vpop.permute.xlu0 %561
        %v564 = vpack.c.bf16 %v535, %v535
        %v565 = vpack.c.bf16 %v556, %v556
        %v566 = vpack.c.bf16 %v559, %v559
        %v567 = vpack.c.bf16 %v562, %v562
        %569 = vrot.lane.b32.xlu0 %v550, 96
        %v570 = vpop.permute.xlu0 %569
        %vm571 = vcmask 64512
        %v573 = vsel %vm571, %v550, 0
        %v576 = vsel %vm571, %v570, 0
        %578 = vmatprep.subr.bf16.mxu0 0
        %579 = vmatpush1.bf16.xpose.msra.mxu0 0
        %580 = vmatprep.subr.bf16.mxu0 0
        %581 = vmatpush1.bf16.xpose.msra.mxu0 0
        %582 = vmatprep.subr.bf16.mxu0 0
        %583 = vmatpush1.bf16.xpose.msra.mxu0 0
        %584 = vmatprep.subr.bf16.mxu0 0
        %585 = vmatpush1.bf16.xpose.msra.mxu0 0
        %586 = vmatprep.subr.bf16.mxu0 0
        %587 = vmatpush1.bf16.xpose.msra.mxu0 0
        %588 = vmatprep.subr.bf16.mxu0 0
        %589 = vmatpush1.bf16.xpose.msra.mxu0 0
        %590 = vmatprep.subr.bf16.mxu0 0
        %591 = vmatpush1.bf16.xpose.msra.mxu0 0
        %592 = vmatprep.subr.bf16.mxu0 0
        %593 = vmatpush1.bf16.xpose.msra.mxu0 %v576
        %594 = vmatprep.subr.bf16.mxu0 0
        %595 = vmatpush2.bf16.xpose.msra.mxu0 0
        %596 = vmatprep.subr.bf16.mxu0 0
        %597 = vmatpush2.bf16.xpose.msra.mxu0 0
        %598 = vmatprep.subr.bf16.mxu0 0
        %599 = vmatpush2.bf16.xpose.msra.mxu0 0
        %600 = vmatprep.subr.bf16.mxu0 0
        %601 = vmatpush2.bf16.xpose.msra.mxu0 0
        %602 = vmatprep.subr.bf16.mxu0 0
        %603 = vmatpush2.bf16.xpose.msra.mxu0 0
        %604 = vmatprep.subr.bf16.mxu0 0
        %605 = vmatpush2.bf16.xpose.msra.mxu0 0
        %606 = vmatprep.subr.bf16.mxu0 0
        %607 = vmatpush2.bf16.xpose.msra.mxu0 0
        %608 = vmatprep.subr.bf16.mxu0 0
        %609 = vmatpush2.bf16.xpose.msra.mxu0 0
        %610 = vmatprep.mubr.bf16.mxu0 0
        %611 = vmatmul.mubr.bf16.gmra.mxu0 %v573
        %v612 = vpop.f32.mrf.mxu0
        %v613 = vadd.f32 0.0, %v612
        %v614 = vpop.f32.mrf.mxu0
        %v615 = vpop.f32.mrf.mxu0
        %v616 = vpop.f32.mrf.mxu0
        %617 = vdwg.mxu0
        %619 = vrot.lane.b32.xlu0 %v551, 96
        %v620 = vpop.permute.xlu0 %619
        %v622 = vsel %vm571, %v551, 0
        %v625 = vsel %vm571, %v620, 0
        %627 = vmatprep.subr.bf16.mxu0 0
        %628 = vmatpush1.bf16.xpose.msra.mxu0 0
        %629 = vmatprep.subr.bf16.mxu0 0
        %630 = vmatpush1.bf16.xpose.msra.mxu0 0
        %631 = vmatprep.subr.bf16.mxu0 0
        %632 = vmatpush1.bf16.xpose.msra.mxu0 0
        %633 = vmatprep.subr.bf16.mxu0 0
        %634 = vmatpush1.bf16.xpose.msra.mxu0 0
        %635 = vmatprep.subr.bf16.mxu0 0
        %636 = vmatpush1.bf16.xpose.msra.mxu0 0
        %637 = vmatprep.subr.bf16.mxu0 0
        %638 = vmatpush1.bf16.xpose.msra.mxu0 0
        %639 = vmatprep.subr.bf16.mxu0 0
        %640 = vmatpush1.bf16.xpose.msra.mxu0 0
        %641 = vmatprep.subr.bf16.mxu0 0
        %642 = vmatpush1.bf16.xpose.msra.mxu0 %v625
        %643 = vmatprep.subr.bf16.mxu0 0
        %644 = vmatpush2.bf16.xpose.msra.mxu0 0
        %645 = vmatprep.subr.bf16.mxu0 0
        %646 = vmatpush2.bf16.xpose.msra.mxu0 0
        %647 = vmatprep.subr.bf16.mxu0 0
        %648 = vmatpush2.bf16.xpose.msra.mxu0 0
        %649 = vmatprep.subr.bf16.mxu0 0
        %650 = vmatpush2.bf16.xpose.msra.mxu0 0
        %651 = vmatprep.subr.bf16.mxu0 0
        %652 = vmatpush2.bf16.xpose.msra.mxu0 0
        %653 = vmatprep.subr.bf16.mxu0 0
        %654 = vmatpush2.bf16.xpose.msra.mxu0 0
        %655 = vmatprep.subr.bf16.mxu0 0
        %656 = vmatpush2.bf16.xpose.msra.mxu0 0
        %657 = vmatprep.subr.bf16.mxu0 0
        %658 = vmatpush2.bf16.xpose.msra.mxu0 0
        %659 = vmatprep.mubr.bf16.mxu0 0
        %660 = vmatmul.mubr.bf16.gmra.mxu0 %v622
        %v661 = vpop.f32.mrf.mxu0
        %v662 = vadd.f32 0.0, %v661
        %v663 = vpop.f32.mrf.mxu0
        %v664 = vpop.f32.mrf.mxu0
        %v665 = vpop.f32.mrf.mxu0
        %666 = vdwg.mxu0
        %668 = vrot.lane.b32.xlu0 %v552, 96
        %v669 = vpop.permute.xlu0 %668
        %v671 = vsel %vm571, %v552, 0
        %v674 = vsel %vm571, %v669, 0
        %676 = vmatprep.subr.bf16.mxu0 0
        %677 = vmatpush1.bf16.xpose.msra.mxu0 0
        %678 = vmatprep.subr.bf16.mxu0 0
        %679 = vmatpush1.bf16.xpose.msra.mxu0 0
        %680 = vmatprep.subr.bf16.mxu0 0
        %681 = vmatpush1.bf16.xpose.msra.mxu0 0
        %682 = vmatprep.subr.bf16.mxu0 0
        %683 = vmatpush1.bf16.xpose.msra.mxu0 0
        %684 = vmatprep.subr.bf16.mxu0 0
        %685 = vmatpush1.bf16.xpose.msra.mxu0 0
        %686 = vmatprep.subr.bf16.mxu0 0
        %687 = vmatpush1.bf16.xpose.msra.mxu0 0
        %688 = vmatprep.subr.bf16.mxu0 0
        %689 = vmatpush1.bf16.xpose.msra.mxu0 0
        %690 = vmatprep.subr.bf16.mxu0 0
        %691 = vmatpush1.bf16.xpose.msra.mxu0 %v674
        %692 = vmatprep.subr.bf16.mxu0 0
        %693 = vmatpush2.bf16.xpose.msra.mxu0 0
        %694 = vmatprep.subr.bf16.mxu0 0
        %695 = vmatpush2.bf16.xpose.msra.mxu0 0
        %696 = vmatprep.subr.bf16.mxu0 0
        %697 = vmatpush2.bf16.xpose.msra.mxu0 0
        %698 = vmatprep.subr.bf16.mxu0 0
        %699 = vmatpush2.bf16.xpose.msra.mxu0 0
        %700 = vmatprep.subr.bf16.mxu0 0
        %701 = vmatpush2.bf16.xpose.msra.mxu0 0
        %702 = vmatprep.subr.bf16.mxu0 0
        %703 = vmatpush2.bf16.xpose.msra.mxu0 0
        %704 = vmatprep.subr.bf16.mxu0 0
        %705 = vmatpush2.bf16.xpose.msra.mxu0 0
        %706 = vmatprep.subr.bf16.mxu0 0
        %707 = vmatpush2.bf16.xpose.msra.mxu0 0
        %708 = vmatprep.mubr.bf16.mxu0 0
        %709 = vmatmul.mubr.bf16.gmra.mxu0 %v671
        %v710 = vpop.f32.mrf.mxu0
        %v711 = vadd.f32 0.0, %v710
        %v712 = vpop.f32.mrf.mxu0
        %v713 = vpop.f32.mrf.mxu0
        %v714 = vpop.f32.mrf.mxu0
        %715 = vdwg.mxu0
        %717 = vrot.lane.b32.xlu0 %v553, 96
        %v718 = vpop.permute.xlu0 %717
        %v720 = vsel %vm571, %v553, 0
        %v723 = vsel %vm571, %v718, 0
        %725 = vmatprep.subr.bf16.mxu0 0
        %726 = vmatpush1.bf16.xpose.msra.mxu0 0
        %727 = vmatprep.subr.bf16.mxu0 0
        %728 = vmatpush1.bf16.xpose.msra.mxu0 0
        %729 = vmatprep.subr.bf16.mxu0 0
        %730 = vmatpush1.bf16.xpose.msra.mxu0 0
        %731 = vmatprep.subr.bf16.mxu0 0
        %732 = vmatpush1.bf16.xpose.msra.mxu0 0
        %733 = vmatprep.subr.bf16.mxu0 0
        %734 = vmatpush1.bf16.xpose.msra.mxu0 0
        %735 = vmatprep.subr.bf16.mxu0 0
        %736 = vmatpush1.bf16.xpose.msra.mxu0 0
        %737 = vmatprep.subr.bf16.mxu0 0
        %738 = vmatpush1.bf16.xpose.msra.mxu0 0
        %739 = vmatprep.subr.bf16.mxu0 0
        %740 = vmatpush1.bf16.xpose.msra.mxu0 %v723
        %741 = vmatprep.subr.bf16.mxu0 0
        %742 = vmatpush2.bf16.xpose.msra.mxu0 0
        %743 = vmatprep.subr.bf16.mxu0 0
        %744 = vmatpush2.bf16.xpose.msra.mxu0 0
        %745 = vmatprep.subr.bf16.mxu0 0
        %746 = vmatpush2.bf16.xpose.msra.mxu0 0
        %747 = vmatprep.subr.bf16.mxu0 0
        %748 = vmatpush2.bf16.xpose.msra.mxu0 0
        %749 = vmatprep.subr.bf16.mxu0 0
        %750 = vmatpush2.bf16.xpose.msra.mxu0 0
        %751 = vmatprep.subr.bf16.mxu0 0
        %752 = vmatpush2.bf16.xpose.msra.mxu0 0
        %753 = vmatprep.subr.bf16.mxu0 0
        %754 = vmatpush2.bf16.xpose.msra.mxu0 0
        %755 = vmatprep.subr.bf16.mxu0 0
        %756 = vmatpush2.bf16.xpose.msra.mxu0 0
        %757 = vmatprep.mubr.bf16.mxu0 0
        %758 = vmatmul.mubr.bf16.gmra.mxu0 %v720
        %v759 = vpop.f32.mrf.mxu0
        %v760 = vadd.f32 0.0, %v759
        %v761 = vpop.f32.mrf.mxu0
        %v762 = vpop.f32.mrf.mxu0
        %v763 = vpop.f32.mrf.mxu0
        %764 = vdwg.mxu0
        %v765 = vsel %vm571, %v613, -inf
        %766 = vmax.xlane.f32.xlu0 %v765
        %v767 = vpop.xlane.xlu0 %766
        %v768 = vsel %vm571, %v662, -inf
        %769 = vmax.xlane.f32.xlu0 %v768
        %v770 = vpop.xlane.xlu0 %769
        %v771 = vsel %vm571, %v711, -inf
        %772 = vmax.xlane.f32.xlu0 %v771
        %v773 = vpop.xlane.xlu0 %772
        %v774 = vsel %vm571, %v760, -inf
        %775 = vmax.xlane.f32.xlu0 %v774
        %v776 = vpop.xlane.xlu0 %775
        %v777 = vsub.f32 %v613, %v767
        %v778 = vsub.f32 %v662, %v770
        %v779 = vsub.f32 %v711, %v773
        %v780 = vsub.f32 %v760, %v776
        %v781 = vmul.f32 %v777, 1.442695
        %v782 = vpow.pop %v781
        %v783 = vmul.f32 %v778, 1.442695
        %v784 = vpow.pop %v783
        %v785 = vmul.f32 %v779, 1.442695
        %v786 = vpow.pop %v785
        %v787 = vmul.f32 %v780, 1.442695
        %v788 = vpow.pop %v787
        %v789 = vsel %vm571, %v782, 0.0
        %790 = vadd.xlane.f32.xlu0 %v789
        %v791 = vpop.xlane.xlu0 %790
        %v792 = vsel %vm571, %v784, 0.0
        %793 = vadd.xlane.f32.xlu0 %v792
        %v794 = vpop.xlane.xlu0 %793
        %v795 = vsel %vm571, %v786, 0.0
        %796 = vadd.xlane.f32.xlu0 %v795
        %v797 = vpop.xlane.xlu0 %796
        %v798 = vsel %vm571, %v788, 0.0
        %799 = vadd.xlane.f32.xlu0 %v798
        %v800 = vpop.xlane.xlu0 %799
        %v801 = vrcp.pop %v791
        %v802 = vrcp.pop %v794
        %v803 = vrcp.pop %v797
        %v804 = vrcp.pop %v800
        %v805 = vmul.f32 %v782, %v801
        %v806 = vmul.f32 %v784, %v802
        %v807 = vmul.f32 %v786, %v803
        %v808 = vmul.f32 %v788, %v804
        %v809 = vpack.c.bf16 %v805, %v805
        %v810 = vpack.c.bf16 %v806, %v806
        %v811 = vpack.c.bf16 %v807, %v807
        %v812 = vpack.c.bf16 %v808, %v808
        %v814 = vsel %vm571, %v809, 0
        %vm816 = vcmask 1043456
        %v818 = vsel %vm816, %v564, 0
        %820 = vmatprep.subr.bf16.mxu0 0
        %821 = vmatpush1.bf16.msra.mxu0 0
        %822 = vmatprep.subr.bf16.mxu0 0
        %823 = vmatpush1.bf16.msra.mxu0 0
        %824 = vmatprep.subr.bf16.mxu0 0
        %825 = vmatpush1.bf16.msra.mxu0 0
        %826 = vmatprep.subr.bf16.mxu0 0
        %827 = vmatpush1.bf16.msra.mxu0 0
        %828 = vmatprep.subr.bf16.mxu0 0
        %829 = vmatpush1.bf16.msra.mxu0 0
        %830 = vmatprep.subr.bf16.mxu0 0
        %831 = vmatpush1.bf16.msra.mxu0 0
        %832 = vmatprep.subr.bf16.mxu0 0
        %833 = vmatpush1.bf16.msra.mxu0 0
        %834 = vmatprep.subr.bf16.mxu0 0
        %835 = vmatpush1.bf16.msra.mxu0 %v818
        %836 = vmatprep.subr.bf16.mxu0 0
        %837 = vmatpush2.bf16.msra.mxu0 0
        %838 = vmatprep.subr.bf16.mxu0 0
        %839 = vmatpush2.bf16.msra.mxu0 0
        %840 = vmatprep.subr.bf16.mxu0 0
        %841 = vmatpush2.bf16.msra.mxu0 0
        %842 = vmatprep.subr.bf16.mxu0 0
        %843 = vmatpush2.bf16.msra.mxu0 0
        %844 = vmatprep.subr.bf16.mxu0 0
        %845 = vmatpush2.bf16.msra.mxu0 0
        %846 = vmatprep.subr.bf16.mxu0 0
        %847 = vmatpush2.bf16.msra.mxu0 0
        %848 = vmatprep.subr.bf16.mxu0 0
        %849 = vmatpush2.bf16.msra.mxu0 0
        %850 = vmatprep.subr.bf16.mxu0 0
        %851 = vmatpush2.bf16.msra.mxu0 0
        %852 = vmatprep.mubr.bf16.mxu0 0
        %853 = vmatmul.mubr.bf16.gmra.mxu0 %v814
        %v854 = vpop.f32.mrf.mxu0
        %v855 = vadd.f32 0.0, %v854
        %v856 = vpop.f32.mrf.mxu0
        %v857 = vpop.f32.mrf.mxu0
        %v858 = vpop.f32.mrf.mxu0
        %859 = vdwg.mxu0
        %v861 = vsel %vm571, %v810, 0
        %v864 = vsel %vm816, %v565, 0
        %866 = vmatprep.subr.bf16.mxu0 0
        %867 = vmatpush1.bf16.msra.mxu0 0
        %868 = vmatprep.subr.bf16.mxu0 0
        %869 = vmatpush1.bf16.msra.mxu0 0
        %870 = vmatprep.subr.bf16.mxu0 0
        %871 = vmatpush1.bf16.msra.mxu0 0
        %872 = vmatprep.subr.bf16.mxu0 0
        %873 = vmatpush1.bf16.msra.mxu0 0
        %874 = vmatprep.subr.bf16.mxu0 0
        %875 = vmatpush1.bf16.msra.mxu0 0
        %876 = vmatprep.subr.bf16.mxu0 0
        %877 = vmatpush1.bf16.msra.mxu0 0
        %878 = vmatprep.subr.bf16.mxu0 0
        %879 = vmatpush1.bf16.msra.mxu0 0
        %880 = vmatprep.subr.bf16.mxu0 0
        %881 = vmatpush1.bf16.msra.mxu0 %v864
        %882 = vmatprep.subr.bf16.mxu0 0
        %883 = vmatpush2.bf16.msra.mxu0 0
        %884 = vmatprep.subr.bf16.mxu0 0
        %885 = vmatpush2.bf16.msra.mxu0 0
        %886 = vmatprep.subr.bf16.mxu0 0
        %887 = vmatpush2.bf16.msra.mxu0 0
        %888 = vmatprep.subr.bf16.mxu0 0
        %889 = vmatpush2.bf16.msra.mxu0 0
        %890 = vmatprep.subr.bf16.mxu0 0
        %891 = vmatpush2.bf16.msra.mxu0 0
        %892 = vmatprep.subr.bf16.mxu0 0
        %893 = vmatpush2.bf16.msra.mxu0 0
        %894 = vmatprep.subr.bf16.mxu0 0
        %895 = vmatpush2.bf16.msra.mxu0 0
        %896 = vmatprep.subr.bf16.mxu0 0
        %897 = vmatpush2.bf16.msra.mxu0 0
        %898 = vmatprep.mubr.bf16.mxu0 0
        %899 = vmatmul.mubr.bf16.gmra.mxu0 %v861
        %v900 = vpop.f32.mrf.mxu0
        %v901 = vadd.f32 0.0, %v900
        %v902 = vpop.f32.mrf.mxu0
        %v903 = vpop.f32.mrf.mxu0
        %v904 = vpop.f32.mrf.mxu0
        %905 = vdwg.mxu0
        %v907 = vsel %vm571, %v811, 0
        %v910 = vsel %vm816, %v566, 0
        %912 = vmatprep.subr.bf16.mxu0 0
        %913 = vmatpush1.bf16.msra.mxu0 0
        %914 = vmatprep.subr.bf16.mxu0 0
        %915 = vmatpush1.bf16.msra.mxu0 0
        %916 = vmatprep.subr.bf16.mxu0 0
        %917 = vmatpush1.bf16.msra.mxu0 0
        %918 = vmatprep.subr.bf16.mxu0 0
        %919 = vmatpush1.bf16.msra.mxu0 0
        %920 = vmatprep.subr.bf16.mxu0 0
        %921 = vmatpush1.bf16.msra.mxu0 0
        %922 = vmatprep.subr.bf16.mxu0 0
        %923 = vmatpush1.bf16.msra.mxu0 0
        %924 = vmatprep.subr.bf16.mxu0 0
        %925 = vmatpush1.bf16.msra.mxu0 0
        %926 = vmatprep.subr.bf16.mxu0 0
        %927 = vmatpush1.bf16.msra.mxu0 %v910
        %928 = vmatprep.subr.bf16.mxu0 0
        %929 = vmatpush2.bf16.msra.mxu0 0
        %930 = vmatprep.subr.bf16.mxu0 0
        %931 = vmatpush2.bf16.msra.mxu0 0
        %932 = vmatprep.subr.bf16.mxu0 0
        %933 = vmatpush2.bf16.msra.mxu0 0
        %934 = vmatprep.subr.bf16.mxu0 0
        %935 = vmatpush2.bf16.msra.mxu0 0
        %936 = vmatprep.subr.bf16.mxu0 0
        %937 = vmatpush2.bf16.msra.mxu0 0
        %938 = vmatprep.subr.bf16.mxu0 0
        %939 = vmatpush2.bf16.msra.mxu0 0
        %940 = vmatprep.subr.bf16.mxu0 0
        %941 = vmatpush2.bf16.msra.mxu0 0
        %942 = vmatprep.subr.bf16.mxu0 0
        %943 = vmatpush2.bf16.msra.mxu0 0
        %944 = vmatprep.mubr.bf16.mxu0 0
        %945 = vmatmul.mubr.bf16.gmra.mxu0 %v907
        %v946 = vpop.f32.mrf.mxu0
        %v947 = vadd.f32 0.0, %v946
        %v948 = vpop.f32.mrf.mxu0
        %v949 = vpop.f32.mrf.mxu0
        %v950 = vpop.f32.mrf.mxu0
        %951 = vdwg.mxu0
        %v953 = vsel %vm571, %v812, 0
        %v956 = vsel %vm816, %v567, 0
        %958 = vmatprep.subr.bf16.mxu0 0
        %959 = vmatpush1.bf16.msra.mxu0 0
        %960 = vmatprep.subr.bf16.mxu0 0
        %961 = vmatpush1.bf16.msra.mxu0 0
        %962 = vmatprep.subr.bf16.mxu0 0
        %963 = vmatpush1.bf16.msra.mxu0 0
        %964 = vmatprep.subr.bf16.mxu0 0
        %965 = vmatpush1.bf16.msra.mxu0 0
        %966 = vmatprep.subr.bf16.mxu0 0
        %967 = vmatpush1.bf16.msra.mxu0 0
        %968 = vmatprep.subr.bf16.mxu0 0
        %969 = vmatpush1.bf16.msra.mxu0 0
        %970 = vmatprep.subr.bf16.mxu0 0
        %971 = vmatpush1.bf16.msra.mxu0 0
        %972 = vmatprep.subr.bf16.mxu0 0
        %973 = vmatpush1.bf16.msra.mxu0 %v956
        %974 = vmatprep.subr.bf16.mxu0 0
        %975 = vmatpush2.bf16.msra.mxu0 0
        %976 = vmatprep.subr.bf16.mxu0 0
        %977 = vmatpush2.bf16.msra.mxu0 0
        %978 = vmatprep.subr.bf16.mxu0 0
        %979 = vmatpush2.bf16.msra.mxu0 0
        %980 = vmatprep.subr.bf16.mxu0 0
        %981 = vmatpush2.bf16.msra.mxu0 0
        %982 = vmatprep.subr.bf16.mxu0 0
        %983 = vmatpush2.bf16.msra.mxu0 0
        %984 = vmatprep.subr.bf16.mxu0 0
        %985 = vmatpush2.bf16.msra.mxu0 0
        %986 = vmatprep.subr.bf16.mxu0 0
        %987 = vmatpush2.bf16.msra.mxu0 0
        %988 = vmatprep.subr.bf16.mxu0 0
        %989 = vmatpush2.bf16.msra.mxu0 0
        %990 = vmatprep.mubr.bf16.mxu0 0
        %991 = vmatmul.mubr.bf16.gmra.mxu0 %v953
        %v992 = vpop.f32.mrf.mxu0
        %v993 = vadd.f32 0.0, %v992
        %v994 = vpop.f32.mrf.mxu0
        %v995 = vpop.f32.mrf.mxu0
        %v996 = vpop.f32.mrf.mxu0
        %997 = vdwg.mxu0
        %999 = vrot.lane.b32.xlu0 %v901, 8
        %v1000 = vpop.permute.xlu0 %999
        %1003 = vrot.lane.b32.xlu0 %v947, 16
        %v1004 = vpop.permute.xlu0 %1003
        %1007 = vrot.lane.b32.xlu0 %v993, 24
        %v1008 = vpop.permute.xlu0 %1007
        %v1010 = vsel %vm571, %v855, %v1000
        %vm1011 = vcmask 130048
        %v1012 = vsel %vm1011, %v1010, %v1004
        %vm1013 = vcmask 195584
        %v1014 = vsel %vm1013, %v1012, %v1008
        %v1015 = vpack.c.bf16 %v1014, %v1014
        %v1016 = vld [vmem:[#allocation10] sm:$0xf]
        %v1017 = vld [vmem:[#allocation10 + $0x4] sm:$0xf]
        %v1018 = vld [vmem:[#allocation10 + $0x8] sm:$0xf]
        %v1019 = vld [vmem:[#allocation10 + $0xc] sm:$0xf]
        %v1020 = vld [vmem:[%s7] sm:$0x1]
        %v1022 = vlaneseq
        %v1023 = vshrl.u32 %v1022, 7
        %v1024 = vsub.s32 0, %v1023
        %v1025 = vrot.slane %v1020, %v1024
        %v1031 = vunpack.c.l.b16 %v1016
        %v1032 = vunpack.c.l.b16 %v1017
        %v1033 = vunpack.c.l.b16 %v1018
        %v1034 = vunpack.c.l.b16 %v1019
        %v1035 = vpack.c.b16 %v1032, %v1031
        %v1036 = vpack.c.b16 %v1034, %v1033
        %v1040 = vsel %vm430, %v1015, 0
        %1042 = vmatprep.subr.bf16.mxu0 0
        %1043 = vmatpush1.bf16.msra.mxu0 0
        %1044 = vmatprep.subr.bf16.mxu0 0
        %1045 = vmatpush1.bf16.msra.mxu0 0
        %1046 = vmatprep.subr.bf16.mxu0 0
        %1047 = vmatpush1.bf16.msra.mxu0 0
        %1048 = vmatprep.subr.bf16.mxu0 0
        %1049 = vmatpush1.bf16.msra.mxu0 0
        %1050 = vmatprep.subr.bf16.mxu0 0
        %1051 = vmatpush1.bf16.msra.mxu0 0
        %1052 = vmatprep.subr.bf16.mxu0 0
        %1053 = vmatpush1.bf16.msra.mxu0 0
        %1054 = vmatprep.subr.bf16.mxu0 0
        %1055 = vmatpush1.bf16.msra.mxu0 %v1036
        %1056 = vmatprep.subr.bf16.mxu0 0
        %1057 = vmatpush1.bf16.msra.mxu0 %v1035
        %1058 = vmatprep.subr.bf16.mxu0 0
        %1059 = vmatpush2.bf16.msra.mxu0 0
        %1060 = vmatprep.subr.bf16.mxu0 0
        %1061 = vmatpush2.bf16.msra.mxu0 0
        %1062 = vmatprep.subr.bf16.mxu0 0
        %1063 = vmatpush2.bf16.msra.mxu0 0
        %1064 = vmatprep.subr.bf16.mxu0 0
        %1065 = vmatpush2.bf16.msra.mxu0 0
        %1066 = vmatprep.subr.bf16.mxu0 0
        %1067 = vmatpush2.bf16.msra.mxu0 0
        %1068 = vmatprep.subr.bf16.mxu0 0
        %1069 = vmatpush2.bf16.msra.mxu0 0
        %1070 = vmatprep.subr.bf16.mxu0 0
        %1071 = vmatpush2.bf16.msra.mxu0 0
        %1072 = vmatprep.subr.bf16.mxu0 0
        %1073 = vmatpush2.bf16.msra.mxu0 0
        %1074 = vmatprep.mubr.bf16.mxu0 0
        %1075 = vmatmul.mubr.bf16.gmra.mxu0 %v1040
        %v1076 = vpop.f32.mrf.mxu0
        %v1077 = vadd.f32 %v1025, %v1076
        %v1078 = vpop.f32.mrf.mxu0
        %v1079 = vpop.f32.mrf.mxu0
        %v1080 = vpop.f32.mrf.mxu0
        %1081 = vdwg.mxu0
        %v1082 = vadd.f32 %v402, %v1077
        %1083 = vst.msk [vmem:[%s400] sm:$0xff] %vm430, %v1082
        %s1084 = sand.u32 %s215, 1
        %s1085 = scalar_lea.sflag [#allocation4], %s1084
        %s1086 = sand.u32 %s215, 1
        %s1087 = smul.addr %s1086, 8
        %s1088 = scalar_lea.vmem [#allocation11], %s1087
        // Predicated region
        $region73: #{tpu_custom_call.1} parent=51 // pred_check
          %p1089 = pneg %p225
        $region74: #{tpu_custom_call.1} parent=51 // pred_check_branch
          %1091 = sbr.rel (%p1089) target = $region76
        $region75: #{tpu_custom_call.1} parent=51 // pred_region
          %s1093 = ssub.s32 128, 128
          %1094 = vsyncadd %s1085, %s1093
          %s1095 = smul.addr %s29, 128
          %s1096 = scalar_lea.hbm %s8, %s1095
          %s1098 = sshll.u32 %s1088, 4
          %s1099 = int_to_ptr.vmem [resolvable:$true] %s1098
          %1101 = dma.vmem_to_hbm [thread:$0]  %s1099, 128, %s1096, %s1085
        $region76: #{tpu_custom_call.1} parent=51 // pred_fallthru
          _
      $region52: #{tpu_custom_call.1} parent=5 // pred_fallthru
        _
      %p1102 = scmp.le.s32.totalorder 2, %s24
      // Predicated region
      $region77: #{tpu_custom_call.1} parent=5 // pred_check
        %p1103 = pneg %p1102
      $region78: #{tpu_custom_call.1} parent=5 // pred_check_branch
        %1105 = sbr.rel (%p1103) target = $region80
      $region79: #{tpu_custom_call.1} parent=5 // pred_region
        %s1106 = ssub.s32 %s24, 2
        // Predicated region
        $region81: #{tpu_custom_call.1} parent=79 // pred_check
          %p1107 = pneg %p231
        $region82: #{tpu_custom_call.1} parent=79 // pred_check_branch
          %1109 = sbr.rel (%p1107) target = $region84
        $region83: #{tpu_custom_call.1} parent=79 // pred_region
          %s1110 = sand.u32 %s216, 1
          %s1111 = scalar_lea.sflag [#allocation4], %s1110
          %s1112 = sand.u32 %s216, 1
          %s1113 = smul.addr %s1112, 8
          %s1114 = scalar_lea.vmem [#allocation11], %s1113
          %1115 = dma.done %s1111, 128
        $region84: #{tpu_custom_call.1} parent=79 // pred_fallthru
          _
      $region80: #{tpu_custom_call.1} parent=5 // pred_fallthru
        _
    $region6: #{tpu_custom_call.1} parent=1 // loop_footer
      %s28 = sadd.s32 1, %s24
    $region7: #{tpu_custom_call.1} parent=1 // loop_footer_branch
      %23 = sbr.rel target = $region3
    $region8: #{tpu_custom_call.1} parent=1 // loop_exit
      _
    %1116 = vsyncpa [#allocation3], 1
    %s1117 = scalar_lea.sflag [#allocation3], 1
    %1118 = vsyncpa %s1117, 1
    %1119 = vsyncpa [#allocation6], 1
    %s1120 = scalar_lea.sflag [#allocation6], 1
    %1121 = vsyncpa %s1120, 1
    %1122 = vsyncpa [#allocation9], 1
    %1123 = vsyncpa [#allocation4], 1
    %s1124 = scalar_lea.sflag [#allocation4], 1
    %1125 = vsyncpa %s1124, 1

// kernel: tpu_custom_call.1
$region0: #{tpu_custom_call.1}
  #allocation0 [shape = 'u32[]', space=smem, size = 0x4, offset = 0x4, fixed_abs, tag = 'smem constant byte address 0x4 - core index']
  #allocation1 [shape = 'u32[144,128]{1,0:T(1,128)}', space=vmem, size = 0x12000, scoped, tag = 'internal scratch']
  %s0 = inlined_call_operand.hbm [shape: f32[2,8,32], index: 0, kind: input, shape index: {}]
  %s1 = inlined_call_operand.hbm [shape: f32[2,8,32], index: 1, kind: input, shape index: {}]
  %s2 = inlined_call_operand.hbm [shape: bf16[32,64], index: 2, kind: input, shape index: {}]
  %s3 = inlined_call_operand.vmem [shape: f32[1,64], index: 3, kind: input, shape index: {}]
  %s4 = inlined_call_operand.hbm [shape: bf16[32,32], index: 4, kind: input, shape index: {}]
  %s5 = inlined_call_operand.vmem [shape: f32[1,32], index: 5, kind: input, shape index: {}]
  %s6 = inlined_call_operand.hbm [shape: bf16[32,32], index: 6, kind: input, shape index: {}]
  %s7 = inlined_call_operand.vmem [shape: f32[1,32], index: 7, kind: input, shape index: {}]
  %s8 = inlined_call_operand.hbm [shape: f32[2,8,32], index: 8, kind: output, shape index: {}]
  %s9 = sld [smem:[#allocation0]]
  $region85: #{tpu_custom_call.1} parent=0
    _
  %s11 = ssub.s32 1, %s9
  %s12 = scalar_select 0, %s11, %s9
  $region1: #{tpu_custom_call.1} parent=0
    #allocation2 [shape = 'u8[8192]{0}', space=vmem, size = 0x2000, scoped, tag = 'input window, operand 0']
    #allocation3 [shape = 's32[2]{0}', space=sflag, size = 0x8, scoped, tag = 'scoped memory for tpu_custom_call.1']
    #allocation4 [shape = 's32[2]{0}', space=sflag, size = 0x8, scoped, tag = 'scoped memory for tpu_custom_call.1']
    #allocation5 [shape = 'u8[8192]{0}', space=vmem, size = 0x2000, scoped, tag = 'input window, operand 1']
    #allocation6 [shape = 's32[2]{0}', space=sflag, size = 0x8, scoped, tag = 'scoped memory for tpu_custom_call.1']
    #allocation7 [shape = 'u8[8192]{0}', space=vmem, size = 0x2000, scoped, tag = 'input window, operand 2, single buffered']
    #allocation8 [shape = 'u8[8192]{0}', space=vmem, size = 0x2000, scoped, tag = 'input window, operand 4, single buffered']
    #allocation9 [shape = 's32[1]{0}', space=sflag, size = 0x4, scoped, tag = 'scoped memory for tpu_custom_call.1']
    #allocation10 [shape = 'u8[8192]{0}', space=vmem, size = 0x2000, scoped, tag = 'input window, operand 6, single buffered']
    #allocation11 [shape = 'u8[8192]{0}', space=vmem, size = 0x2000, scoped, tag = 'output window, operand 0']
    %13 = vsyncpa [#allocation3], 0
    %s14 = scalar_lea.sflag [#allocation3], 1
    %15 = vsyncpa %s14, 0
    %16 = vsyncpa [#allocation6], 0
    %s17 = scalar_lea.sflag [#allocation6], 1
    %18 = vsyncpa %s17, 0
    %19 = vsyncpa [#allocation9], 0
    %20 = vsyncpa [#allocation4], 0
    %s21 = scalar_lea.sflag [#allocation4], 1
    %22 = vsyncpa %s21, 0
    loop: start=0, step=1, limit=4
    $region2: #{tpu_custom_call.1} parent=1 // loop_pre_header
      _
    $region3: #{tpu_custom_call.1} parent=1 // loop_header
      %s24 = sphi 0, %s28
      %p25 = scmp.ge.s32.totalorder %s24, 4
      %s34 = sphi 0, %s36
      %s37 = sphi 0, %s34
      %s38 = sphi 0, %s37
      %s54 = sphi 0, %s38
      %s60 = sphi 0, %s62
      %s63 = sphi 0, %s60
      %s64 = sphi 0, %s63
      %s80 = sphi 0, %s64
      %s84 = sphi 0, %s84
      %s86 = sphi 0, %s84
      %s87 = sphi 0, %s86
      %s101 = sphi 0, %s87
      %s105 = sphi 0, %s105
      %s107 = sphi 0, %s105
      %s108 = sphi 0, %s107
      %s122 = sphi 0, %s108
      %s126 = sphi 0, %s126
      %s128 = sphi 0, %s126
      %s129 = sphi 0, %s128
      %s143 = sphi 0, %s129
      %s147 = sphi 0, %s147
      %s149 = sphi 0, %s147
      %s150 = sphi 0, %s149
      %s164 = sphi 0, %s150
      %s168 = sphi 0, %s168
      %s170 = sphi 0, %s168
      %s171 = sphi 0, %s170
      %s185 = sphi 0, %s171
      %s189 = sphi 0, %s189
      %s191 = sphi 0, %s189
      %s192 = sphi 0, %s191
      %s206 = sphi 0, %s192
      %s212 = sphi 0, %s214
      %s215 = sphi 0, %s212
      %s216 = sphi 0, %s215
      %s232 = sphi 0, %s216
    $region4: #{tpu_custom_call.1} parent=1 // loop_header_branch
      %27 = sbr.rel (%p25) target = $region8
    $region5: #{tpu_custom_call.1} parent=1 // loop_body
      %s29 = ssub.s32 %s24, 1
      %s30 = ssub.s32 %s24, 2
      %s31 = sadd.s32 %s24, 1
      %s32 = ssub.s32 %s24, %s31
      %p33 = scmp.eq.s32.totalorder %s32, 0
      %s35 = sadd.s32 %s34, 1
      %s36 = scalar_select %p33, %s34, %s35
      %p39 = pneg %p33
      %p40 = scmp.eq.s32.totalorder %s24, 1
      %p41 = por %p39, %p40
      %p42 = scmp.ne.s32.totalorder %s34, %s37
      %p43 = scmp.eq.s32.totalorder %s24, 0
      %p44 = por %p42, %p43
      %p45 = scmp.ne.s32.totalorder %s34, %s37
      %p46 = scmp.eq.s32.totalorder %s29, 1
      %p47 = por %p45, %p46
      %p48 = scmp.ne.s32.totalorder %s37, %s38
      %p49 = scmp.eq.s32.totalorder %s29, 0
      %p50 = por %p48, %p49
      %p51 = scmp.ne.s32.totalorder %s37, %s38
      %p52 = scmp.eq.s32.totalorder %s30, 1
      %p53 = por %p51, %p52
      %p55 = scmp.ne.s32.totalorder %s38, %s54
      %p56 = scmp.eq.s32.totalorder %s30, 0
      %p57 = por %p55, %p56
      %s58 = ssub.s32 %s24, %s31
      %p59 = scmp.eq.s32.totalorder %s58, 0
      %s61 = sadd.s32 %s60, 1
      %s62 = scalar_select %p59, %s60, %s61
      %p65 = pneg %p59
      %p66 = scmp.eq.s32.totalorder %s24, 1
      %p67 = por %p65, %p66
      %p68 = scmp.ne.s32.totalorder %s60, %s63
      %p69 = scmp.eq.s32.totalorder %s24, 0
      %p70 = por %p68, %p69
      %p71 = scmp.ne.s32.totalorder %s60, %s63
      %p72 = scmp.eq.s32.totalorder %s29, 1
      %p73 = por %p71, %p72
      %p74 = scmp.ne.s32.totalorder %s63, %s64
      %p75 = scmp.eq.s32.totalorder %s29, 0
      %p76 = por %p74, %p75
      %p77 = scmp.ne.s32.totalorder %s63, %s64
      %p78 = scmp.eq.s32.totalorder %s30, 1
      %p79 = por %p77, %p78
      %p81 = scmp.ne.s32.totalorder %s64, %s80
      %p82 = scmp.eq.s32.totalorder %s30, 0
      %p83 = por %p81, %p82
      %s85 = sadd.s32 %s84, 1
      %p88 = scmp.eq.s32.totalorder %s24, 1
      %p89 = scmp.ne.s32.totalorder %s84, %s86
      %p90 = scmp.eq.s32.totalorder %s24, 0
      %p91 = por %p89, %p90
      %p92 = scmp.ne.s32.totalorder %s84, %s86
      %p93 = scmp.eq.s32.totalorder %s29, 1
      %p94 = por %p92, %p93
      %p95 = scmp.ne.s32.totalorder %s86, %s87
      %p96 = scmp.eq.s32.totalorder %s29, 0
      %p97 = por %p95, %p96
      %p98 = scmp.ne.s32.totalorder %s86, %s87
      %p99 = scmp.eq.s32.totalorder %s30, 1
      %p100 = por %p98, %p99
      %p102 = scmp.ne.s32.totalorder %s87, %s101
      %p103 = scmp.eq.s32.totalorder %s30, 0
      %p104 = por %p102, %p103
      %s106 = sadd.s32 %s105, 1
      %p109 = scmp.eq.s32.totalorder %s24, 1
      %p110 = scmp.ne.s32.totalorder %s105, %s107
      %p111 = scmp.eq.s32.totalorder %s24, 0
      %p112 = por %p110, %p111
      %p113 = scmp.ne.s32.totalorder %s105, %s107
      %p114 = scmp.eq.s32.totalorder %s29, 1
      %p115 = por %p113, %p114
      %p116 = scmp.ne.s32.totalorder %s107, %s108
      %p117 = scmp.eq.s32.totalorder %s29, 0
      %p118 = por %p116, %p117
      %p119 = scmp.ne.s32.totalorder %s107, %s108
      %p120 = scmp.eq.s32.totalorder %s30, 1
      %p121 = por %p119, %p120
      %p123 = scmp.ne.s32.totalorder %s108, %s122
      %p124 = scmp.eq.s32.totalorder %s30, 0
      %p125 = por %p123, %p124
      %s127 = sadd.s32 %s126, 1
      %p130 = scmp.eq.s32.totalorder %s24, 1
      %p131 = scmp.ne.s32.totalorder %s126, %s128
      %p132 = scmp.eq.s32.totalorder %s24, 0
      %p133 = por %p131, %p132
      %p134 = scmp.ne.s32.totalorder %s126, %s128
      %p135 = scmp.eq.s32.totalorder %s29, 1
      %p136 = por %p134, %p135
      %p137 = scmp.ne.s32.totalorder %s128, %s129
      %p138 = scmp.eq.s32.totalorder %s29, 0
      %p139 = por %p137, %p138
      %p140 = scmp.ne.s32.totalorder %s128, %s129
      %p141 = scmp.eq.s32.totalorder %s30, 1
      %p142 = por %p140, %p141
      %p144 = scmp.ne.s32.totalorder %s129, %s143
      %p145 = scmp.eq.s32.totalorder %s30, 0
      %p146 = por %p144, %p145
      %s148 = sadd.s32 %s147, 1
      %p151 = scmp.eq.s32.totalorder %s24, 1
      %p152 = scmp.ne.s32.totalorder %s147, %s149
      %p153 = scmp.eq.s32.totalorder %s24, 0
      %p154 = por %p152, %p153
      %p155 = scmp.ne.s32.totalorder %s147, %s149
      %p156 = scmp.eq.s32.totalorder %s29, 1
      %p157 = por %p155, %p156
      %p158 = scmp.ne.s32.totalorder %s149, %s150
      %p159 = scmp.eq.s32.totalorder %s29, 0
      %p160 = por %p158, %p159
      %p161 = scmp.ne.s32.totalorder %s149, %s150
      %p162 = scmp.eq.s32.totalorder %s30, 1
      %p163 = por %p161, %p162
      %p165 = scmp.ne.s32.totalorder %s150, %s164
      %p166 = scmp.eq.s32.totalorder %s30, 0
      %p167 = por %p165, %p166
      %s169 = sadd.s32 %s168, 1
      %p172 = scmp.eq.s32.totalorder %s24, 1
      %p173 = scmp.ne.s32.totalorder %s168, %s170
      %p174 = scmp.eq.s32.totalorder %s24, 0
      %p175 = por %p173, %p174
      %p176 = scmp.ne.s32.totalorder %s168, %s170
      %p177 = scmp.eq.s32.totalorder %s29, 1
      %p178 = por %p176, %p177
      %p179 = scmp.ne.s32.totalorder %s170, %s171
      %p180 = scmp.eq.s32.totalorder %s29, 0
      %p181 = por %p179, %p180
      %p182 = scmp.ne.s32.totalorder %s170, %s171
      %p183 = scmp.eq.s32.totalorder %s30, 1
      %p184 = por %p182, %p183
      %p186 = scmp.ne.s32.totalorder %s171, %s185
      %p187 = scmp.eq.s32.totalorder %s30, 0
      %p188 = por %p186, %p187
      %s190 = sadd.s32 %s189, 1
      %p193 = scmp.eq.s32.totalorder %s24, 1
      %p194 = scmp.ne.s32.totalorder %s189, %s191
      %p195 = scmp.eq.s32.totalorder %s24, 0
      %p196 = por %p194, %p195
      %p197 = scmp.ne.s32.totalorder %s189, %s191
      %p198 = scmp.eq.s32.totalorder %s29, 1
      %p199 = por %p197, %p198
      %p200 = scmp.ne.s32.totalorder %s191, %s192
      %p201 = scmp.eq.s32.totalorder %s29, 0
      %p202 = por %p200, %p201
      %p203 = scmp.ne.s32.totalorder %s191, %s192
      %p204 = scmp.eq.s32.totalorder %s30, 1
      %p205 = por %p203, %p204
      %p207 = scmp.ne.s32.totalorder %s192, %s206
      %p208 = scmp.eq.s32.totalorder %s30, 0
      %p209 = por %p207, %p208
      %s210 = ssub.s32 %s24, %s31
      %p211 = scmp.eq.s32.totalorder %s210, 0
      %s213 = sadd.s32 %s212, 1
      %s214 = scalar_select %p211, %s212, %s213
      %p217 = pneg %p211
      %p218 = scmp.eq.s32.totalorder %s24, 1
      %p219 = por %p217, %p218
      %p220 = scmp.ne.s32.totalorder %s212, %s215
      %p221 = scmp.eq.s32.totalorder %s24, 0
      %p222 = por %p220, %p221
      %p223 = scmp.ne.s32.totalorder %s212, %s215
      %p224 = scmp.eq.s32.totalorder %s29, 1
      %p225 = por %p223, %p224
      %p226 = scmp.ne.s32.totalorder %s215, %s216
      %p227 = scmp.eq.s32.totalorder %s29, 0
      %p228 = por %p226, %p227
      %p229 = scmp.ne.s32.totalorder %s215, %s216
      %p230 = scmp.eq.s32.totalorder %s30, 1
      %p231 = por %p229, %p230
      %p233 = scmp.ne.s32.totalorder %s216, %s232
      %p234 = scmp.eq.s32.totalorder %s30, 0
      %p235 = por %p233, %p234
      %p236 = scmp.le.s32.totalorder 1, %s24
      %p237 = scmp.lt.s32.totalorder %s24, 3
      %p238 = pnand %p236, %p237
      %p239 = pneg %p238
      // Predicated region
      $region9: #{tpu_custom_call.1} parent=5 // pred_check
        _
      $region10: #{tpu_custom_call.1} parent=5 // pred_check_branch
        %241 = sbr.rel (%p238) target = $region12
      $region11: #{tpu_custom_call.1} parent=5 // pred_region
        %s242 = ssub.s32 %s24, 1
        // Predicated region
        $region13: #{tpu_custom_call.1} parent=11 // pred_check
          %p243 = pneg %p97
        $region14: #{tpu_custom_call.1} parent=11 // pred_check_branch
          %245 = sbr.rel (%p243) target = $region16
        $region15: #{tpu_custom_call.1} parent=11 // pred_region
          %s247 = ssub.s32 256, 256
          %248 = vsyncadd [#allocation6], %s247
          %s249 = sshll.u32 [#allocation7], 4
          %s250 = int_to_ptr.vmem [resolvable:$true] %s249
          %255 = dma.hbm_to_vmem [thread:$0]  %s2, 256, %s250, [#allocation6], 64, 64, 4
        $region16: #{tpu_custom_call.1} parent=11 // pred_fallthru
          _
        // Predicated region
        $region17: #{tpu_custom_call.1} parent=11 // pred_check
          %p256 = pneg %p118
        $region18: #{tpu_custom_call.1} parent=11 // pred_check_branch
          %258 = sbr.rel (%p256) target = $region20
        $region19: #{tpu_custom_call.1} parent=11 // pred_region
          _
        $region20: #{tpu_custom_call.1} parent=11 // pred_fallthru
          _
        // Predicated region
        $region21: #{tpu_custom_call.1} parent=11 // pred_check
          %p259 = pneg %p139
        $region22: #{tpu_custom_call.1} parent=11 // pred_check_branch
          %261 = sbr.rel (%p259) target = $region24
        $region23: #{tpu_custom_call.1} parent=11 // pred_region
          %s263 = ssub.s32 256, 256
          %264 = vsyncadd [#allocation9], %s263
          %s265 = sshll.u32 [#allocation8], 4
          %s266 = int_to_ptr.vmem [resolvable:$true] %s265
          %271 = dma.hbm_to_vmem [thread:$0]  %s4, 256, %s266, [#allocation9], 64, 64, 4
        $region24: #{tpu_custom_call.1} parent=11 // pred_fallthru
          _
        // Predicated region
        $region25: #{tpu_custom_call.1} parent=11 // pred_check
          %p272 = pneg %p160
        $region26: #{tpu_custom_call.1} parent=11 // pred_check_branch
          %274 = sbr.rel (%p272) target = $region28
        $region27: #{tpu_custom_call.1} parent=11 // pred_region
          _
        $region28: #{tpu_custom_call.1} parent=11 // pred_fallthru
          _
        // Predicated region
        $region29: #{tpu_custom_call.1} parent=11 // pred_check
          %p275 = pneg %p181
        $region30: #{tpu_custom_call.1} parent=11 // pred_check_branch
          %277 = sbr.rel (%p275) target = $region32
        $region31: #{tpu_custom_call.1} parent=11 // pred_region
          %s279 = ssub.s32 256, 256
          %280 = vsyncadd [#allocation9], %s279
          %s281 = sshll.u32 [#allocation10], 4
          %s282 = int_to_ptr.vmem [resolvable:$true] %s281
          %287 = dma.hbm_to_vmem [thread:$0]  %s6, 256, %s282, [#allocation9], 64, 64, 4
        $region32: #{tpu_custom_call.1} parent=11 // pred_fallthru
          _
        // Predicated region
        $region33: #{tpu_custom_call.1} parent=11 // pred_check
          %p288 = pneg %p202
        $region34: #{tpu_custom_call.1} parent=11 // pred_check_branch
          %290 = sbr.rel (%p288) target = $region36
        $region35: #{tpu_custom_call.1} parent=11 // pred_region
          _
        $region36: #{tpu_custom_call.1} parent=11 // pred_fallthru
          _
      $region12: #{tpu_custom_call.1} parent=5 // pred_fallthru
        _
      %p291 = scmp.lt.s32.totalorder %s24, 2
      // Predicated region
      $region37: #{tpu_custom_call.1} parent=5 // pred_check
        %p292 = pneg %p291
      $region38: #{tpu_custom_call.1} parent=5 // pred_check_branch
        %294 = sbr.rel (%p292) target = $region40
      $region39: #{tpu_custom_call.1} parent=5 // pred_region
        // Predicated region
        $region41: #{tpu_custom_call.1} parent=39 // pred_check
          %p295 = pneg %p44
        $region42: #{tpu_custom_call.1} parent=39 // pred_check_branch
          %297 = sbr.rel (%p295) target = $region44
        $region43: #{tpu_custom_call.1} parent=39 // pred_region
          %s298 = sand.u32 %s34, 1
          %s299 = scalar_lea.sflag [#allocation3], %s298
          %s300 = sand.u32 %s34, 1
          %s301 = smul.addr %s300, 8
          %s302 = scalar_lea.vmem [#allocation2], %s301
          %s304 = ssub.s32 128, 128
          %305 = vsyncadd %s299, %s304
          %s306 = smul.addr %s24, 128
          %s307 = scalar_lea.hbm %s0, %s306
          %s309 = sshll.u32 %s302, 4
          %s310 = int_to_ptr.vmem [resolvable:$true] %s309
          %312 = dma.hbm_to_vmem [thread:$0]  %s307, 128, %s310, %s299
        $region44: #{tpu_custom_call.1} parent=39 // pred_fallthru
          _
        // Predicated region
        $region45: #{tpu_custom_call.1} parent=39 // pred_check
          %p313 = pneg %p70
        $region46: #{tpu_custom_call.1} parent=39 // pred_check_branch
          %315 = sbr.rel (%p313) target = $region48
        $region47: #{tpu_custom_call.1} parent=39 // pred_region
          %s316 = sand.u32 %s24, 1
          %s317 = scalar_lea.sflag [#allocation6], %s316
          %s318 = sand.u32 %s60, 1
          %s319 = smul.addr %s318, 8
          %s320 = scalar_lea.vmem [#allocation5], %s319
          %s322 = ssub.s32 128, 128
          %323 = vsyncadd %s317, %s322
          %s324 = smul.addr %s24, 128
          %s325 = scalar_lea.hbm %s1, %s324
          %s327 = sshll.u32 %s320, 4
          %s328 = int_to_ptr.vmem [resolvable:$true] %s327
          %330 = dma.hbm_to_vmem [thread:$0]  %s325, 128, %s328, %s317
        $region48: #{tpu_custom_call.1} parent=39 // pred_fallthru
          _
      $region40: #{tpu_custom_call.1} parent=5 // pred_fallthru
        _
      %p331 = scmp.le.s32.totalorder 1, %s24
      %p332 = scmp.lt.s32.totalorder %s24, 3
      %p333 = pnand %p331, %p332
      %p334 = pneg %p333
      // Predicated region
      $region49: #{tpu_custom_call.1} parent=5 // pred_check
        _
      $region50: #{tpu_custom_call.1} parent=5 // pred_check_branch
        %336 = sbr.rel (%p333) target = $region52
      $region51: #{tpu_custom_call.1} parent=5 // pred_region
        %s337 = ssub.s32 %s24, 1
        %s338 = sand.u32 %s37, 1
        %s339 = scalar_lea.sflag [#allocation3], %s338
        %s340 = sand.u32 %s37, 1
        %s341 = smul.addr %s340, 8
        %s342 = scalar_lea.vmem [#allocation2], %s341
        // Predicated region
        $region53: #{tpu_custom_call.1} parent=51 // pred_check
          %p343 = pneg %p50
        $region54: #{tpu_custom_call.1} parent=51 // pred_check_branch
          %345 = sbr.rel (%p343) target = $region56
        $region55: #{tpu_custom_call.1} parent=51 // pred_region
          %346 = dma.done %s339, 128
        $region56: #{tpu_custom_call.1} parent=51 // pred_fallthru
          _
        %s347 = sand.u32 %s29, 1
        %s348 = scalar_lea.sflag [#allocation6], %s347
        %s349 = sand.u32 %s63, 1
        %s350 = smul.addr %s349, 8
        %s351 = scalar_lea.vmem [#allocation5], %s350
        // Predicated region
        $region57: #{tpu_custom_call.1} parent=51 // pred_check
          %p352 = pneg %p76
        $region58: #{tpu_custom_call.1} parent=51 // pred_check_branch
          %354 = sbr.rel (%p352) target = $region60
        $region59: #{tpu_custom_call.1} parent=51 // pred_region
          %355 = dma.done %s348, 128
        $region60: #{tpu_custom_call.1} parent=51 // pred_fallthru
          _
        // Predicated region
        $region61: #{tpu_custom_call.1} parent=51 // pred_check
          %p356 = pneg %p97
        $region62: #{tpu_custom_call.1} parent=51 // pred_check_branch
          %358 = sbr.rel (%p356) target = $region64
        $region63: #{tpu_custom_call.1} parent=51 // pred_region
          %359 = dma.done [#allocation6], 256
        $region64: #{tpu_custom_call.1} parent=51 // pred_fallthru
          _
        // Predicated region
        $region65: #{tpu_custom_call.1} parent=51 // pred_check
          %p360 = pneg %p139
        $region66: #{tpu_custom_call.1} parent=51 // pred_check_branch
          %362 = sbr.rel (%p360) target = $region68
        $region67: #{tpu_custom_call.1} parent=51 // pred_region
          %363 = dma.done [#allocation9], 256
        $region68: #{tpu_custom_call.1} parent=51 // pred_fallthru
          _
        // Predicated region
        $region69: #{tpu_custom_call.1} parent=51 // pred_check
          %p364 = pneg %p181
        $region70: #{tpu_custom_call.1} parent=51 // pred_check_branch
          %366 = sbr.rel (%p364) target = $region72
        $region71: #{tpu_custom_call.1} parent=51 // pred_region
          %367 = dma.done [#allocation9], 256
        $region72: #{tpu_custom_call.1} parent=51 // pred_fallthru
          _
        %s368 = sand.u32 %s37, 1
        %s369 = scalar_lea.sflag [#allocation3], %s368
        %s370 = sand.u32 %s37, 1
        %s371 = smul.addr %s370, 8
        %s372 = scalar_lea.vmem [#allocation2], %s371
        %p373 = pneg %p50
        %p374 = pneg %p47
        %s375 = sand.u32 %s29, 1
        %s376 = scalar_lea.sflag [#allocation6], %s375
        %s377 = sand.u32 %s63, 1
        %s378 = smul.addr %s377, 8
        %s379 = scalar_lea.vmem [#allocation5], %s378
        %p380 = pneg %p76
        %p381 = pneg %p73
        %p382 = pneg %p97
        %p383 = pneg %p94
        %p384 = pneg %p118
        %p385 = pneg %p115
        %p386 = pneg %p139
        %p387 = pneg %p136
        %p388 = pneg %p160
        %p389 = pneg %p157
        %p390 = pneg %p181
        %p391 = pneg %p178
        %p392 = pneg %p202
        %p393 = pneg %p199
        %p394 = pneg %p228
        %p395 = pneg %p225
        %s396 = sand.u32 %s215, 1
        %s397 = scalar_lea.sflag [#allocation4], %s396
        %s398 = sand.u32 %s215, 1
        %s399 = smul.addr %s398, 8
        %s400 = scalar_lea.vmem [#allocation11], %s399
        %v402 = vld [vmem:[%s342] sm:$0xff]
        %v403 = vpack.c.bf16 %v402, %v402
        %v404 = vld [vmem:[%s351] sm:$0xff]
        %v405 = vadd.f32 %v402, %v404
        %v406 = vpack.c.bf16 %v405, %v405
        %v407 = vld [vmem:[#allocation7] sm:$0xf]
        %v408 = vld [vmem:[#allocation7 + $0x4] sm:$0xf]
        %v409 = vld [vmem:[#allocation7 + $0x8] sm:$0xf]
        %v410 = vld [vmem:[#allocation7 + $0xc] sm:$0xf]
        %v411 = vld [vmem:[%s3] sm:$0x1]
        %v413 = vlaneseq
        %v414 = vshrl.u32 %v413, 7
        %v415 = vsub.s32 0, %v414
        %v416 = vrot.slane %v411, %v415
        %v422 = vunpack.c.l.b16 %v407
        %v423 = vunpack.c.l.b16 %v408
        %v424 = vunpack.c.l.b16 %v409
        %v425 = vunpack.c.l.b16 %v410
        %v426 = vpack.c.b16 %v423, %v422
        %v427 = vpack.c.b16 %v425, %v424
        %vm430 = vcmask 261120
        %v432 = vsel %vm430, %v406, 0
        %434 = vmatprep.subr.bf16.mxu0 0
        %435 = vmatpush1.bf16.msra.mxu0 0
        %436 = vmatprep.subr.bf16.mxu0 0
        %437 = vmatpush1.bf16.msra.mxu0 0
        %438 = vmatprep.subr.bf16.mxu0 0
        %439 = vmatpush1.bf16.msra.mxu0 0
        %440 = vmatprep.subr.bf16.mxu0 0
        %441 = vmatpush1.bf16.msra.mxu0 0
        %442 = vmatprep.subr.bf16.mxu0 0
        %443 = vmatpush1.bf16.msra.mxu0 0
        %444 = vmatprep.subr.bf16.mxu0 0
        %445 = vmatpush1.bf16.msra.mxu0 0
        %446 = vmatprep.subr.bf16.mxu0 0
        %447 = vmatpush1.bf16.msra.mxu0 %v427
        %448 = vmatprep.subr.bf16.mxu0 0
        %449 = vmatpush1.bf16.msra.mxu0 %v426
        %450 = vmatprep.subr.bf16.mxu0 0
        %451 = vmatpush2.bf16.msra.mxu0 0
        %452 = vmatprep.subr.bf16.mxu0 0
        %453 = vmatpush2.bf16.msra.mxu0 0
        %454 = vmatprep.subr.bf16.mxu0 0
        %455 = vmatpush2.bf16.msra.mxu0 0
        %456 = vmatprep.subr.bf16.mxu0 0
        %457 = vmatpush2.bf16.msra.mxu0 0
        %458 = vmatprep.subr.bf16.mxu0 0
        %459 = vmatpush2.bf16.msra.mxu0 0
        %460 = vmatprep.subr.bf16.mxu0 0
        %461 = vmatpush2.bf16.msra.mxu0 0
        %462 = vmatprep.subr.bf16.mxu0 0
        %463 = vmatpush2.bf16.msra.mxu0 0
        %464 = vmatprep.subr.bf16.mxu0 0
        %465 = vmatpush2.bf16.msra.mxu0 0
        %466 = vmatprep.mubr.bf16.mxu0 0
        %467 = vmatmul.mubr.bf16.gmra.mxu0 %v432
        %v468 = vpop.f32.mrf.mxu0
        %v469 = vadd.f32 %v416, %v468
        %v470 = vpop.f32.mrf.mxu0
        %v471 = vpop.f32.mrf.mxu0
        %v472 = vpop.f32.mrf.mxu0
        %473 = vdwg.mxu0
        %v474 = vld [vmem:[#allocation8] sm:$0xf]
        %v475 = vld [vmem:[#allocation8 + $0x4] sm:$0xf]
        %v476 = vld [vmem:[#allocation8 + $0x8] sm:$0xf]
        %v477 = vld [vmem:[#allocation8 + $0xc] sm:$0xf]
        %v478 = vld [vmem:[%s5] sm:$0x1]
        %v480 = vlaneseq
        %v481 = vshrl.u32 %v480, 7
        %v482 = vsub.s32 0, %v481
        %v483 = vrot.slane %v478, %v482
        %v489 = vunpack.c.l.b16 %v474
        %v490 = vunpack.c.l.b16 %v475
        %v491 = vunpack.c.l.b16 %v476
        %v492 = vunpack.c.l.b16 %v477
        %v493 = vpack.c.b16 %v490, %v489
        %v494 = vpack.c.b16 %v492, %v491
        %v498 = vsel %vm430, %v403, 0
        %500 = vmatprep.subr.bf16.mxu0 0
        %501 = vmatpush1.bf16.msra.mxu0 0
        %502 = vmatprep.subr.bf16.mxu0 0
        %503 = vmatpush1.bf16.msra.mxu0 0
        %504 = vmatprep.subr.bf16.mxu0 0
        %505 = vmatpush1.bf16.msra.mxu0 0
        %506 = vmatprep.subr.bf16.mxu0 0
        %507 = vmatpush1.bf16.msra.mxu0 0
        %508 = vmatprep.subr.bf16.mxu0 0
        %509 = vmatpush1.bf16.msra.mxu0 0
        %510 = vmatprep.subr.bf16.mxu0 0
        %511 = vmatpush1.bf16.msra.mxu0 0
        %512 = vmatprep.subr.bf16.mxu0 0
        %513 = vmatpush1.bf16.msra.mxu0 %v494
        %514 = vmatprep.subr.bf16.mxu0 0
        %515 = vmatpush1.bf16.msra.mxu0 %v493
        %516 = vmatprep.subr.bf16.mxu0 0
        %517 = vmatpush2.bf16.msra.mxu0 0
        %518 = vmatprep.subr.bf16.mxu0 0
        %519 = vmatpush2.bf16.msra.mxu0 0
        %520 = vmatprep.subr.bf16.mxu0 0
        %521 = vmatpush2.bf16.msra.mxu0 0
        %522 = vmatprep.subr.bf16.mxu0 0
        %523 = vmatpush2.bf16.msra.mxu0 0
        %524 = vmatprep.subr.bf16.mxu0 0
        %525 = vmatpush2.bf16.msra.mxu0 0
        %526 = vmatprep.subr.bf16.mxu0 0
        %527 = vmatpush2.bf16.msra.mxu0 0
        %528 = vmatprep.subr.bf16.mxu0 0
        %529 = vmatpush2.bf16.msra.mxu0 0
        %530 = vmatprep.subr.bf16.mxu0 0
        %531 = vmatpush2.bf16.msra.mxu0 0
        %532 = vmatprep.mubr.bf16.mxu0 0
        %533 = vmatmul.mubr.bf16.gmra.mxu0 %v498
        %v534 = vpop.f32.mrf.mxu0
        %v535 = vadd.f32 %v483, %v534
        %v536 = vpop.f32.mrf.mxu0
        %v537 = vpop.f32.mrf.mxu0
        %v538 = vpop.f32.mrf.mxu0
        %539 = vdwg.mxu0
        %541 = vrot.lane.b32.xlu0 %v469, 120
        %v542 = vpop.permute.xlu0 %541
        %544 = vrot.lane.b32.xlu0 %v469, 112
        %v545 = vpop.permute.xlu0 %544
        %547 = vrot.lane.b32.xlu0 %v469, 104
        %v548 = vpop.permute.xlu0 %547
        %v550 = vpack.c.bf16 %v469, %v469
        %v551 = vpack.c.bf16 %v542, %v542
        %v552 = vpack.c.bf16 %v545, %v545
        %v553 = vpack.c.bf16 %v548, %v548
        %555 = vrot.lane.b32.xlu0 %v535, 120
        %v556 = vpop.permute.xlu0 %555
        %558 = vrot.lane.b32.xlu0 %v535, 112
        %v559 = vpop.permute.xlu0 %558
        %561 = vrot.lane.b32.xlu0 %v535, 104
        %v562 = vpop.permute.xlu0 %561
        %v564 = vpack.c.bf16 %v535, %v535
        %v565 = vpack.c.bf16 %v556, %v556
        %v566 = vpack.c.bf16 %v559, %v559
        %v567 = vpack.c.bf16 %v562, %v562
        %569 = vrot.lane.b32.xlu0 %v550, 96
        %v570 = vpop.permute.xlu0 %569
        %vm571 = vcmask 64512
        %v573 = vsel %vm571, %v550, 0
        %v576 = vsel %vm571, %v570, 0
        %578 = vmatprep.subr.bf16.mxu0 0
        %579 = vmatpush1.bf16.xpose.msra.mxu0 0
        %580 = vmatprep.subr.bf16.mxu0 0
        %581 = vmatpush1.bf16.xpose.msra.mxu0 0
        %582 = vmatprep.subr.bf16.mxu0 0
        %583 = vmatpush1.bf16.xpose.msra.mxu0 0
        %584 = vmatprep.subr.bf16.mxu0 0
        %585 = vmatpush1.bf16.xpose.msra.mxu0 0
        %586 = vmatprep.subr.bf16.mxu0 0
        %587 = vmatpush1.bf16.xpose.msra.mxu0 0
        %588 = vmatprep.subr.bf16.mxu0 0
        %589 = vmatpush1.bf16.xpose.msra.mxu0 0
        %590 = vmatprep.subr.bf16.mxu0 0
        %591 = vmatpush1.bf16.xpose.msra.mxu0 0
        %592 = vmatprep.subr.bf16.mxu0 0
        %593 = vmatpush1.bf16.xpose.msra.mxu0 %v576
        %594 = vmatprep.subr.bf16.mxu0 0
        %595 = vmatpush2.bf16.xpose.msra.mxu0 0
        %596 = vmatprep.subr.bf16.mxu0 0
        %597 = vmatpush2.bf16.xpose.msra.mxu0 0
        %598 = vmatprep.subr.bf16.mxu0 0
        %599 = vmatpush2.bf16.xpose.msra.mxu0 0
        %600 = vmatprep.subr.bf16.mxu0 0
        %601 = vmatpush2.bf16.xpose.msra.mxu0 0
        %602 = vmatprep.subr.bf16.mxu0 0
        %603 = vmatpush2.bf16.xpose.msra.mxu0 0
        %604 = vmatprep.subr.bf16.mxu0 0
        %605 = vmatpush2.bf16.xpose.msra.mxu0 0
        %606 = vmatprep.subr.bf16.mxu0 0
        %607 = vmatpush2.bf16.xpose.msra.mxu0 0
        %608 = vmatprep.subr.bf16.mxu0 0
        %609 = vmatpush2.bf16.xpose.msra.mxu0 0
        %610 = vmatprep.mubr.bf16.mxu0 0
        %611 = vmatmul.mubr.bf16.gmra.mxu0 %v573
        %v612 = vpop.f32.mrf.mxu0
        %v613 = vadd.f32 0.0, %v612
        %v614 = vpop.f32.mrf.mxu0
        %v615 = vpop.f32.mrf.mxu0
        %v616 = vpop.f32.mrf.mxu0
        %617 = vdwg.mxu0
        %619 = vrot.lane.b32.xlu0 %v551, 96
        %v620 = vpop.permute.xlu0 %619
        %v622 = vsel %vm571, %v551, 0
        %v625 = vsel %vm571, %v620, 0
        %627 = vmatprep.subr.bf16.mxu0 0
        %628 = vmatpush1.bf16.xpose.msra.mxu0 0
        %629 = vmatprep.subr.bf16.mxu0 0
        %630 = vmatpush1.bf16.xpose.msra.mxu0 0
        %631 = vmatprep.subr.bf16.mxu0 0
        %632 = vmatpush1.bf16.xpose.msra.mxu0 0
        %633 = vmatprep.subr.bf16.mxu0 0
        %634 = vmatpush1.bf16.xpose.msra.mxu0 0
        %635 = vmatprep.subr.bf16.mxu0 0
        %636 = vmatpush1.bf16.xpose.msra.mxu0 0
        %637 = vmatprep.subr.bf16.mxu0 0
        %638 = vmatpush1.bf16.xpose.msra.mxu0 0
        %639 = vmatprep.subr.bf16.mxu0 0
        %640 = vmatpush1.bf16.xpose.msra.mxu0 0
        %641 = vmatprep.subr.bf16.mxu0 0
        %642 = vmatpush1.bf16.xpose.msra.mxu0 %v625
        %643 = vmatprep.subr.bf16.mxu0 0
        %644 = vmatpush2.bf16.xpose.msra.mxu0 0
        %645 = vmatprep.subr.bf16.mxu0 0
        %646 = vmatpush2.bf16.xpose.msra.mxu0 0
        %647 = vmatprep.subr.bf16.mxu0 0
        %648 = vmatpush2.bf16.xpose.msra.mxu0 0
        %649 = vmatprep.subr.bf16.mxu0 0
        %650 = vmatpush2.bf16.xpose.msra.mxu0 0
        %651 = vmatprep.subr.bf16.mxu0 0
        %652 = vmatpush2.bf16.xpose.msra.mxu0 0
        %653 = vmatprep.subr.bf16.mxu0 0
        %654 = vmatpush2.bf16.xpose.msra.mxu0 0
        %655 = vmatprep.subr.bf16.mxu0 0
        %656 = vmatpush2.bf16.xpose.msra.mxu0 0
        %657 = vmatprep.subr.bf16.mxu0 0
        %658 = vmatpush2.bf16.xpose.msra.mxu0 0
        %659 = vmatprep.mubr.bf16.mxu0 0
        %660 = vmatmul.mubr.bf16.gmra.mxu0 %v622
        %v661 = vpop.f32.mrf.mxu0
        %v662 = vadd.f32 0.0, %v661
        %v663 = vpop.f32.mrf.mxu0
        %v664 = vpop.f32.mrf.mxu0
        %v665 = vpop.f32.mrf.mxu0
        %666 = vdwg.mxu0
        %668 = vrot.lane.b32.xlu0 %v552, 96
        %v669 = vpop.permute.xlu0 %668
        %v671 = vsel %vm571, %v552, 0
        %v674 = vsel %vm571, %v669, 0
        %676 = vmatprep.subr.bf16.mxu0 0
        %677 = vmatpush1.bf16.xpose.msra.mxu0 0
        %678 = vmatprep.subr.bf16.mxu0 0
        %679 = vmatpush1.bf16.xpose.msra.mxu0 0
        %680 = vmatprep.subr.bf16.mxu0 0
        %681 = vmatpush1.bf16.xpose.msra.mxu0 0
        %682 = vmatprep.subr.bf16.mxu0 0
        %683 = vmatpush1.bf16.xpose.msra.mxu0 0
        %684 = vmatprep.subr.bf16.mxu0 0
        %685 = vmatpush1.bf16.xpose.msra.mxu0 0
        %686 = vmatprep.subr.bf16.mxu0 0
        %687 = vmatpush1.bf16.xpose.msra.mxu0 0
        %688 = vmatprep.subr.bf16.mxu0 0
        %689 = vmatpush1.bf16.xpose.msra.mxu0 0
        %690 = vmatprep.subr.bf16.mxu0 0
        %691 = vmatpush1.bf16.xpose.msra.mxu0 %v674
        %692 = vmatprep.subr.bf16.mxu0 0
        %693 = vmatpush2.bf16.xpose.msra.mxu0 0
        %694 = vmatprep.subr.bf16.mxu0 0
        %695 = vmatpush2.bf16.xpose.msra.mxu0 0
        %696 = vmatprep.subr.bf16.mxu0 0
        %697 = vmatpush2.bf16.xpose.msra.mxu0 0
        %698 = vmatprep.subr.bf16.mxu0 0
        %699 = vmatpush2.bf16.xpose.msra.mxu0 0
        %700 = vmatprep.subr.bf16.mxu0 0
        %701 = vmatpush2.bf16.xpose.msra.mxu0 0
        %702 = vmatprep.subr.bf16.mxu0 0
        %703 = vmatpush2.bf16.xpose.msra.mxu0 0
        %704 = vmatprep.subr.bf16.mxu0 0
        %705 = vmatpush2.bf16.xpose.msra.mxu0 0
        %706 = vmatprep.subr.bf16.mxu0 0
        %707 = vmatpush2.bf16.xpose.msra.mxu0 0
        %708 = vmatprep.mubr.bf16.mxu0 0
        %709 = vmatmul.mubr.bf16.gmra.mxu0 %v671
        %v710 = vpop.f32.mrf.mxu0
        %v711 = vadd.f32 0.0, %v710
        %v712 = vpop.f32.mrf.mxu0
        %v713 = vpop.f32.mrf.mxu0
        %v714 = vpop.f32.mrf.mxu0
        %715 = vdwg.mxu0
        %717 = vrot.lane.b32.xlu0 %v553, 96
        %v718 = vpop.permute.xlu0 %717
        %v720 = vsel %vm571, %v553, 0
        %v723 = vsel %vm571, %v718, 0
        %725 = vmatprep.subr.bf16.mxu0 0
        %726 = vmatpush1.bf16.xpose.msra.mxu0 0
        %727 = vmatprep.subr.bf16.mxu0 0
        %728 = vmatpush1.bf16.xpose.msra.mxu0 0
        %729 = vmatprep.subr.bf16.mxu0 0
        %730 = vmatpush1.bf16.xpose.msra.mxu0 0
        %731 = vmatprep.subr.bf16.mxu0 0
        %732 = vmatpush1.bf16.xpose.msra.mxu0 0
        %733 = vmatprep.subr.bf16.mxu0 0
        %734 = vmatpush1.bf16.xpose.msra.mxu0 0
        %735 = vmatprep.subr.bf16.mxu0 0
        %736 = vmatpush1.bf16.xpose.msra.mxu0 0
        %737 = vmatprep.subr.bf16.mxu0 0
        %738 = vmatpush1.bf16.xpose.msra.mxu0 0
        %739 = vmatprep.subr.bf16.mxu0 0
        %740 = vmatpush1.bf16.xpose.msra.mxu0 %v723
        %741 = vmatprep.subr.bf16.mxu0 0
        %742 = vmatpush2.bf16.xpose.msra.mxu0 0
        %743 = vmatprep.subr.bf16.mxu0 0
        %744 = vmatpush2.bf16.xpose.msra.mxu0 0
        %745 = vmatprep.subr.bf16.mxu0 0
        %746 = vmatpush2.bf16.xpose.msra.mxu0 0
        %747 = vmatprep.subr.bf16.mxu0 0
        %748 = vmatpush2.bf16.xpose.msra.mxu0 0
        %749 = vmatprep.subr.bf16.mxu0 0
        %750 = vmatpush2.bf16.xpose.msra.mxu0 0
        %751 = vmatprep.subr.bf16.mxu0 0
        %752 = vmatpush2.bf16.xpose.msra.mxu0 0
        %753 = vmatprep.subr.bf16.mxu0 0
        %754 = vmatpush2.bf16.xpose.msra.mxu0 0
        %755 = vmatprep.subr.bf16.mxu0 0
        %756 = vmatpush2.bf16.xpose.msra.mxu0 0
        %757 = vmatprep.mubr.bf16.mxu0 0
        %758 = vmatmul.mubr.bf16.gmra.mxu0 %v720
        %v759 = vpop.f32.mrf.mxu0
        %v760 = vadd.f32 0.0, %v759
        %v761 = vpop.f32.mrf.mxu0
        %v762 = vpop.f32.mrf.mxu0
        %v763 = vpop.f32.mrf.mxu0
        %764 = vdwg.mxu0
        %v765 = vsel %vm571, %v613, -inf
        %766 = vmax.xlane.f32.xlu0 %v765
        %v767 = vpop.xlane.xlu0 %766
        %v768 = vsel %vm571, %v662, -inf
        %769 = vmax.xlane.f32.xlu0 %v768
        %v770 = vpop.xlane.xlu0 %769
        %v771 = vsel %vm571, %v711, -inf
        %772 = vmax.xlane.f32.xlu0 %v771
        %v773 = vpop.xlane.xlu0 %772
        %v774 = vsel %vm571, %v760, -inf
        %775 = vmax.xlane.f32.xlu0 %v774
        %v776 = vpop.xlane.xlu0 %775
        %v777 = vsub.f32 %v613, %v767
        %v778 = vsub.f32 %v662, %v770
        %v779 = vsub.f32 %v711, %v773
        %v780 = vsub.f32 %v760, %v776
        %v781 = vmul.f32 %v777, 1.442695
        %v782 = vpow.pop %v781
        %v783 = vmul.f32 %v778, 1.442695
        %v784 = vpow.pop %v783
        %v785 = vmul.f32 %v779, 1.442695
        %v786 = vpow.pop %v785
        %v787 = vmul.f32 %v780, 1.442695
        %v788 = vpow.pop %v787
        %v789 = vsel %vm571, %v782, 0.0
        %790 = vadd.xlane.f32.xlu0 %v789
        %v791 = vpop.xlane.xlu0 %790
        %v792 = vsel %vm571, %v784, 0.0
        %793 = vadd.xlane.f32.xlu0 %v792
        %v794 = vpop.xlane.xlu0 %793
        %v795 = vsel %vm571, %v786, 0.0
        %796 = vadd.xlane.f32.xlu0 %v795
        %v797 = vpop.xlane.xlu0 %796
        %v798 = vsel %vm571, %v788, 0.0
        %799 = vadd.xlane.f32.xlu0 %v798
        %v800 = vpop.xlane.xlu0 %799
        %v801 = vrcp.pop %v791
        %v802 = vrcp.pop %v794
        %v803 = vrcp.pop %v797
        %v804 = vrcp.pop %v800
        %v805 = vmul.f32 %v782, %v801
        %v806 = vmul.f32 %v784, %v802
        %v807 = vmul.f32 %v786, %v803
        %v808 = vmul.f32 %v788, %v804
        %v809 = vpack.c.bf16 %v805, %v805
        %v810 = vpack.c.bf16 %v806, %v806
        %v811 = vpack.c.bf16 %v807, %v807
        %v812 = vpack.c.bf16 %v808, %v808
        %v814 = vsel %vm571, %v809, 0
        %vm816 = vcmask 1043456
        %v818 = vsel %vm816, %v564, 0
        %820 = vmatprep.subr.bf16.mxu0 0
        %821 = vmatpush1.bf16.msra.mxu0 0
        %822 = vmatprep.subr.bf16.mxu0 0
        %823 = vmatpush1.bf16.msra.mxu0 0
        %824 = vmatprep.subr.bf16.mxu0 0
        %825 = vmatpush1.bf16.msra.mxu0 0
        %826 = vmatprep.subr.bf16.mxu0 0
        %827 = vmatpush1.bf16.msra.mxu0 0
        %828 = vmatprep.subr.bf16.mxu0 0
        %829 = vmatpush1.bf16.msra.mxu0 0
        %830 = vmatprep.subr.bf16.mxu0 0
        %831 = vmatpush1.bf16.msra.mxu0 0
        %832 = vmatprep.subr.bf16.mxu0 0
        %833 = vmatpush1.bf16.msra.mxu0 0
        %834 = vmatprep.subr.bf16.mxu0 0
        %835 = vmatpush1.bf16.msra.mxu0 %v818
        %836 = vmatprep.subr.bf16.mxu0 0
        %837 = vmatpush2.bf16.msra.mxu0 0
        %838 = vmatprep.subr.bf16.mxu0 0
        %839 = vmatpush2.bf16.msra.mxu0 0
        %840 = vmatprep.subr.bf16.mxu0 0
        %841 = vmatpush2.bf16.msra.mxu0 0
        %842 = vmatprep.subr.bf16.mxu0 0
        %843 = vmatpush2.bf16.msra.mxu0 0
        %844 = vmatprep.subr.bf16.mxu0 0
        %845 = vmatpush2.bf16.msra.mxu0 0
        %846 = vmatprep.subr.bf16.mxu0 0
        %847 = vmatpush2.bf16.msra.mxu0 0
        %848 = vmatprep.subr.bf16.mxu0 0
        %849 = vmatpush2.bf16.msra.mxu0 0
        %850 = vmatprep.subr.bf16.mxu0 0
        %851 = vmatpush2.bf16.msra.mxu0 0
        %852 = vmatprep.mubr.bf16.mxu0 0
        %853 = vmatmul.mubr.bf16.gmra.mxu0 %v814
        %v854 = vpop.f32.mrf.mxu0
        %v855 = vadd.f32 0.0, %v854
        %v856 = vpop.f32.mrf.mxu0
        %v857 = vpop.f32.mrf.mxu0
        %v858 = vpop.f32.mrf.mxu0
        %859 = vdwg.mxu0
        %v861 = vsel %vm571, %v810, 0
        %v864 = vsel %vm816, %v565, 0
        %866 = vmatprep.subr.bf16.mxu0 0
        %867 = vmatpush1.bf16.msra.mxu0 0
        %868 = vmatprep.subr.bf16.mxu0 0
        %869 = vmatpush1.bf16.msra.mxu0 0
        %870 = vmatprep.subr.bf16.mxu0 0
        %871 = vmatpush1.bf16.msra.mxu0 0
        %872 = vmatprep.subr.bf16.mxu0 0
        %873 = vmatpush1.bf16.msra.mxu0 0
        %874 = vmatprep.subr.bf16.mxu0 0
        %875 = vmatpush1.bf16.msra.mxu0 0
        %876 = vmatprep.subr.bf16.mxu0 0
        %877 = vmatpush1.bf16.msra.mxu0 0
        %878 = vmatprep.subr.bf16.mxu0 0
        %879 = vmatpush1.bf16.msra.mxu0 0
        %880 = vmatprep.subr.bf16.mxu0 0
        %881 = vmatpush1.bf16.msra.mxu0 %v864
        %882 = vmatprep.subr.bf16.mxu0 0
        %883 = vmatpush2.bf16.msra.mxu0 0
        %884 = vmatprep.subr.bf16.mxu0 0
        %885 = vmatpush2.bf16.msra.mxu0 0
        %886 = vmatprep.subr.bf16.mxu0 0
        %887 = vmatpush2.bf16.msra.mxu0 0
        %888 = vmatprep.subr.bf16.mxu0 0
        %889 = vmatpush2.bf16.msra.mxu0 0
        %890 = vmatprep.subr.bf16.mxu0 0
        %891 = vmatpush2.bf16.msra.mxu0 0
        %892 = vmatprep.subr.bf16.mxu0 0
        %893 = vmatpush2.bf16.msra.mxu0 0
        %894 = vmatprep.subr.bf16.mxu0 0
        %895 = vmatpush2.bf16.msra.mxu0 0
        %896 = vmatprep.subr.bf16.mxu0 0
        %897 = vmatpush2.bf16.msra.mxu0 0
        %898 = vmatprep.mubr.bf16.mxu0 0
        %899 = vmatmul.mubr.bf16.gmra.mxu0 %v861
        %v900 = vpop.f32.mrf.mxu0
        %v901 = vadd.f32 0.0, %v900
        %v902 = vpop.f32.mrf.mxu0
        %v903 = vpop.f32.mrf.mxu0
        %v904 = vpop.f32.mrf.mxu0
        %905 = vdwg.mxu0
        %v907 = vsel %vm571, %v811, 0
        %v910 = vsel %vm816, %v566, 0
        %912 = vmatprep.subr.bf16.mxu0 0
        %913 = vmatpush1.bf16.msra.mxu0 0
        %914 = vmatprep.subr.bf16.mxu0 0
        %915 = vmatpush1.bf16.msra.mxu0 0
        %916 = vmatprep.subr.bf16.mxu0 0
        %917 = vmatpush1.bf16.msra.mxu0 0
        %918 = vmatprep.subr.bf16.mxu0 0
        %919 = vmatpush1.bf16.msra.mxu0 0
        %920 = vmatprep.subr.bf16.mxu0 0
        %921 = vmatpush1.bf16.msra.mxu0 0
        %922 = vmatprep.subr.bf16.mxu0 0
        %923 = vmatpush1.bf16.msra.mxu0 0
        %924 = vmatprep.subr.bf16.mxu0 0
        %925 = vmatpush1.bf16.msra.mxu0 0
        %926 = vmatprep.subr.bf16.mxu0 0
        %927 = vmatpush1.bf16.msra.mxu0 %v910
        %928 = vmatprep.subr.bf16.mxu0 0
        %929 = vmatpush2.bf16.msra.mxu0 0
        %930 = vmatprep.subr.bf16.mxu0 0
        %931 = vmatpush2.bf16.msra.mxu0 0
        %932 = vmatprep.subr.bf16.mxu0 0
        %933 = vmatpush2.bf16.msra.mxu0 0
        %934 = vmatprep.subr.bf16.mxu0 0
        %935 = vmatpush2.bf16.msra.mxu0 0
        %936 = vmatprep.subr.bf16.mxu0 0
        %937 = vmatpush2.bf16.msra.mxu0 0
        %938 = vmatprep.subr.bf16.mxu0 0
        %939 = vmatpush2.bf16.msra.mxu0 0
        %940 = vmatprep.subr.bf16.mxu0 0
        %941 = vmatpush2.bf16.msra.mxu0 0
        %942 = vmatprep.subr.bf16.mxu0 0
        %943 = vmatpush2.bf16.msra.mxu0 0
        %944 = vmatprep.mubr.bf16.mxu0 0
        %945 = vmatmul.mubr.bf16.gmra.mxu0 %v907
        %v946 = vpop.f32.mrf.mxu0
        %v947 = vadd.f32 0.0, %v946
        %v948 = vpop.f32.mrf.mxu0
        %v949 = vpop.f32.mrf.mxu0
        %v950 = vpop.f32.mrf.mxu0
        %951 = vdwg.mxu0
        %v953 = vsel %vm571, %v812, 0
        %v956 = vsel %vm816, %v567, 0
        %958 = vmatprep.subr.bf16.mxu0 0
        %959 = vmatpush1.bf16.msra.mxu0 0
        %960 = vmatprep.subr.bf16.mxu0 0
        %961 = vmatpush1.bf16.msra.mxu0 0
        %962 = vmatprep.subr.bf16.mxu0 0
        %963 = vmatpush1.bf16.msra.mxu0 0
        %964 = vmatprep.subr.bf16.mxu0 0
        %965 = vmatpush1.bf16.msra.mxu0 0
        %966 = vmatprep.subr.bf16.mxu0 0
        %967 = vmatpush1.bf16.msra.mxu0 0
        %968 = vmatprep.subr.bf16.mxu0 0
        %969 = vmatpush1.bf16.msra.mxu0 0
        %970 = vmatprep.subr.bf16.mxu0 0
        %971 = vmatpush1.bf16.msra.mxu0 0
        %972 = vmatprep.subr.bf16.mxu0 0
        %973 = vmatpush1.bf16.msra.mxu0 %v956
        %974 = vmatprep.subr.bf16.mxu0 0
        %975 = vmatpush2.bf16.msra.mxu0 0
        %976 = vmatprep.subr.bf16.mxu0 0
        %977 = vmatpush2.bf16.msra.mxu0 0
        %978 = vmatprep.subr.bf16.mxu0 0
        %979 = vmatpush2.bf16.msra.mxu0 0
        %980 = vmatprep.subr.bf16.mxu0 0
        %981 = vmatpush2.bf16.msra.mxu0 0
        %982 = vmatprep.subr.bf16.mxu0 0
        %983 = vmatpush2.bf16.msra.mxu0 0
        %984 = vmatprep.subr.bf16.mxu0 0
        %985 = vmatpush2.bf16.msra.mxu0 0
        %986 = vmatprep.subr.bf16.mxu0 0
        %987 = vmatpush2.bf16.msra.mxu0 0
        %988 = vmatprep.subr.bf16.mxu0 0
        %989 = vmatpush2.bf16.msra.mxu0 0
        %990 = vmatprep.mubr.bf16.mxu0 0
        %991 = vmatmul.mubr.bf16.gmra.mxu0 %v953
        %v992 = vpop.f32.mrf.mxu0
        %v993 = vadd.f32 0.0, %v992
        %v994 = vpop.f32.mrf.mxu0
        %v995 = vpop.f32.mrf.mxu0
        %v996 = vpop.f32.mrf.mxu0
        %997 = vdwg.mxu0
        %999 = vrot.lane.b32.xlu0 %v901, 8
        %v1000 = vpop.permute.xlu0 %999
        %1003 = vrot.lane.b32.xlu0 %v947, 16
        %v1004 = vpop.permute.xlu0 %1003
        %1007 = vrot.lane.b32.xlu0 %v993, 24
        %v1008 = vpop.permute.xlu0 %1007
        %v1010 = vsel %vm571, %v855, %v1000
        %vm1011 = vcmask 130048
        %v1012 = vsel %vm1011, %v1010, %v1004
        %vm1013 = vcmask 195584
        %v1014 = vsel %vm1013, %v1012, %v1008
        %v1015 = vpack.c.bf16 %v1014, %v1014
        %v1016 = vld [vmem:[#allocation10] sm:$0xf]
        %v1017 = vld [vmem:[#allocation10 + $0x4] sm:$0xf]
        %v1018 = vld [vmem:[#allocation10 + $0x8] sm:$0xf]
        %v1019 = vld [vmem:[#allocation10 + $0xc] sm:$0xf]
        %v1020 = vld [vmem:[%s7] sm:$0x1]
        %v1022 = vlaneseq
        %v1023 = vshrl.u32 %v1022, 7
        %v1024 = vsub.s32 0, %v1023
        %v1025 = vrot.slane %v1020, %v1024
        %v1031 = vunpack.c.l.b16 %v1016
        %v1032 = vunpack.c.l.b16 %v1017
        %v1033 = vunpack.c.l.b16 %v1018
        %v1034 = vunpack.c.l.b16 %v1019
        %v1035 = vpack.c.b16 %v1032, %v1031
        %v1036 = vpack.c.b16 %v1034, %v1033
        %v1040 = vsel %vm430, %v1015, 0
        %1042 = vmatprep.subr.bf16.mxu0 0
        %1043 = vmatpush1.bf16.msra.mxu0 0
        %1044 = vmatprep.subr.bf16.mxu0 0
        %1045 = vmatpush1.bf16.msra.mxu0 0
        %1046 = vmatprep.subr.bf16.mxu0 0
        %1047 = vmatpush1.bf16.msra.mxu0 0
        %1048 = vmatprep.subr.bf16.mxu0 0
        %1049 = vmatpush1.bf16.msra.mxu0 0
        %1050 = vmatprep.subr.bf16.mxu0 0
        %1051 = vmatpush1.bf16.msra.mxu0 0
        %1052 = vmatprep.subr.bf16.mxu0 0
        %1053 = vmatpush1.bf16.msra.mxu0 0
        %1054 = vmatprep.subr.bf16.mxu0 0
        %1055 = vmatpush1.bf16.msra.mxu0 %v1036
        %1056 = vmatprep.subr.bf16.mxu0 0
        %1057 = vmatpush1.bf16.msra.mxu0 %v1035
        %1058 = vmatprep.subr.bf16.mxu0 0
        %1059 = vmatpush2.bf16.msra.mxu0 0
        %1060 = vmatprep.subr.bf16.mxu0 0
        %1061 = vmatpush2.bf16.msra.mxu0 0
        %1062 = vmatprep.subr.bf16.mxu0 0
        %1063 = vmatpush2.bf16.msra.mxu0 0
        %1064 = vmatprep.subr.bf16.mxu0 0
        %1065 = vmatpush2.bf16.msra.mxu0 0
        %1066 = vmatprep.subr.bf16.mxu0 0
        %1067 = vmatpush2.bf16.msra.mxu0 0
        %1068 = vmatprep.subr.bf16.mxu0 0
        %1069 = vmatpush2.bf16.msra.mxu0 0
        %1070 = vmatprep.subr.bf16.mxu0 0
        %1071 = vmatpush2.bf16.msra.mxu0 0
        %1072 = vmatprep.subr.bf16.mxu0 0
        %1073 = vmatpush2.bf16.msra.mxu0 0
        %1074 = vmatprep.mubr.bf16.mxu0 0
        %1075 = vmatmul.mubr.bf16.gmra.mxu0 %v1040
        %v1076 = vpop.f32.mrf.mxu0
        %v1077 = vadd.f32 %v1025, %v1076
        %v1078 = vpop.f32.mrf.mxu0
        %v1079 = vpop.f32.mrf.mxu0
        %v1080 = vpop.f32.mrf.mxu0
        %1081 = vdwg.mxu0
        %v1082 = vadd.f32 %v402, %v1077
        %1083 = vst.msk [vmem:[%s400] sm:$0xff] %vm430, %v1082
        %s1084 = sand.u32 %s215, 1
        %s1085 = scalar_lea.sflag [#allocation4], %s1084
        %s1086 = sand.u32 %s215, 1
        %s1087 = smul.addr %s1086, 8
        %s1088 = scalar_lea.vmem [#allocation11], %s1087
        // Predicated region
        $region73: #{tpu_custom_call.1} parent=51 // pred_check
          %p1089 = pneg %p225
        $region74: #{tpu_custom_call.1} parent=51 // pred_check_branch
          %1091 = sbr.rel (%p1089) target = $region76
        $region75: #{tpu_custom_call.1} parent=51 // pred_region
          %s1093 = ssub.s32 128, 128
          %1094 = vsyncadd %s1085, %s1093
          %s1095 = smul.addr %s29, 128
          %s1096 = scalar_lea.hbm %s8, %s1095
          %s1098 = sshll.u32 %s1088, 4
          %s1099 = int_to_ptr.vmem [resolvable:$true] %s1098
          %1101 = dma.vmem_to_hbm [thread:$0]  %s1099, 128, %s1096, %s1085
        $region76: #{tpu_custom_call.1} parent=51 // pred_fallthru
          _
      $region52: #{tpu_custom_call.1} parent=5 // pred_fallthru
        _
      %p1102 = scmp.le.s32.totalorder 2, %s24
      // Predicated region
      $region77: #{tpu_custom_call.1} parent=5 // pred_check
        %p1103 = pneg %p1102
      $region78: #{tpu_custom_call.1} parent=5 // pred_check_branch
        %1105 = sbr.rel (%p1103) target = $region80
      $region79: #{tpu_custom_call.1} parent=5 // pred_region
        %s1106 = ssub.s32 %s24, 2
        // Predicated region
        $region81: #{tpu_custom_call.1} parent=79 // pred_check
          %p1107 = pneg %p231
        $region82: #{tpu_custom_call.1} parent=79 // pred_check_branch
          %1109 = sbr.rel (%p1107) target = $region84
        $region83: #{tpu_custom_call.1} parent=79 // pred_region
          %s1110 = sand.u32 %s216, 1
          %s1111 = scalar_lea.sflag [#allocation4], %s1110
          %s1112 = sand.u32 %s216, 1
          %s1113 = smul.addr %s1112, 8
          %s1114 = scalar_lea.vmem [#allocation11], %s1113
          %1115 = dma.done %s1111, 128
        $region84: #{tpu_custom_call.1} parent=79 // pred_fallthru
          _
      $region80: #{tpu_custom_call.1} parent=5 // pred_fallthru
        _
    $region6: #{tpu_custom_call.1} parent=1 // loop_footer
      %s28 = sadd.s32 1, %s24
    $region7: #{tpu_custom_call.1} parent=1 // loop_footer_branch
      %23 = sbr.rel target = $region3
    $region8: #{tpu_custom_call.1} parent=1 // loop_exit
      _
    %1116 = vsyncpa [#allocation3], 1
    %s1117 = scalar_lea.sflag [#allocation3], 1
    %1118 = vsyncpa %s1117, 1
    %1119 = vsyncpa [#allocation6], 1
    %s1120 = scalar_lea.sflag [#allocation6], 1
    %1121 = vsyncpa %s1120, 1
    %1122 = vsyncpa [#allocation9], 1
    %1123 = vsyncpa [#allocation4], 1
    %s1124 = scalar_lea.sflag [#allocation4], 1
    %1125 = vsyncpa %s1124, 1

</llo_original>
